<compile_context>
chip_gen: v5e
topology: v5e:2x2
jax: 0.10.0
libtpu: 0.0.40
codegen_flags: <defaults>
</compile_context>

<pallas_src>
import jax
import jax.numpy as jnp
from jax.experimental import pallas as pl
from jax.experimental.pallas import tpu as pltpu


def _round_up(x, m):
    return ((x + m - 1) // m) * m


def make_decoder_step_kernel(E, Hp, V):
    """E: embedding dim (word slice of word_feat), Hp: padded hidden dim, V: real vocab size."""

    def kernel(wf_ref, hid_ref, enc_ref, encp_ref,
               w_ah_ref, b_a_ref, v_a_ref,
               w_ih_ref, w_hh_ref, b_ih_ref, b_hh_ref,
               w_out_ref, b_out_ref,
               logp_ref, hid_out_ref):
        wf = wf_ref[...]                    # [B, E+F]    f32  ([word | feature])
        hidden = hid_ref[...]               # [B, Hp]     f32
        enc = enc_ref[...]                  # [B, L, Dp]  bf16
        enc_proj = encp_ref[...]            # [B, L, Hp]  f32  (hoisted enc @ W_attn_enc)

        hidden_b = hidden.astype(jnp.bfloat16)

        # ---------- attention: a = softmax_L( v . tanh(W_h h + W_e enc + b) ) ----------
        hid_proj = jnp.dot(hidden_b, w_ah_ref[...],
                           preferred_element_type=jnp.float32)              # [B, Hp]
        energy = jnp.tanh(enc_proj + hid_proj[:, None, :]
                          + b_a_ref[...][None, :, :])                       # [B, L, Hp]
        scores = jnp.sum(energy * v_a_ref[...][None, :, :], axis=2)         # [B, L]
        scores = scores - jnp.max(scores, axis=1, keepdims=True)
        exp_s = jnp.exp(scores)
        inv = pl.reciprocal(jnp.sum(exp_s, axis=1, keepdims=True), approx=True)
        a = exp_s * inv                                                     # [B, L]

        # weighted = bmm(a[:, None, :], enc).squeeze(1)
        weighted = jnp.sum(a[:, :, None] * enc, axis=1)                     # [B, Dp]  f32

        # ---------- fused GRU step (gate order r, z, n), 2 matmuls ----------
        # x = cat(weighted, word, feature); the weighted|word boundary is 128-lane aligned.
        x = jnp.concatenate([weighted, wf], axis=1)                         # [B, Dp+E+F]
        gx = jnp.dot(x.astype(jnp.bfloat16), w_ih_ref[...],
                     preferred_element_type=jnp.float32) + b_ih_ref[...]    # [B, 3*Hp]
        gh = jnp.dot(hidden_b, w_hh_ref[...],
                     preferred_element_type=jnp.float32) + b_hh_ref[...]    # [B, 3*Hp]

        r = jax.nn.sigmoid(gx[:, 0 * Hp:1 * Hp] + gh[:, 0 * Hp:1 * Hp])
        z = jax.nn.sigmoid(gx[:, 1 * Hp:2 * Hp] + gh[:, 1 * Hp:2 * Hp])
        n = jnp.tanh(gx[:, 2 * Hp:3 * Hp] + r * gh[:, 2 * Hp:3 * Hp])
        h_new = (1.0 - z) * n + z * hidden                                  # [B, Hp]

        # leaky_relu (default negative_slope=0.01)
        act = jnp.where(h_new > 0, h_new, 0.01 * h_new)
        # TODO(synk): F.dropout(p=0.5, training=True) is stochastic; implemented as identity (eval mode).

        # ---------- output linear on cat(act, weighted, word) + masked log_softmax ----------
        word = wf[:, :E]
        out_in = jnp.concatenate([act, weighted, word], axis=1)             # [B, Hp+Dp+E]
        pre = jnp.dot(out_in.astype(jnp.bfloat16), w_out_ref[...],
                      preferred_element_type=jnp.float32) + b_out_ref[...]  # [B, Vp]

        # exclude padded vocab lanes from the softmax normalizer
        col = jax.lax.broadcasted_iota(jnp.int32, pre.shape, 1)
        pre = jnp.where(col < V, pre, jnp.float32(-1e30))
        m = jnp.max(pre, axis=1, keepdims=True)
        sh = pre - m
        lse = jnp.log(jnp.sum(jnp.exp(sh), axis=1, keepdims=True))
        logp_ref[...] = sh - lse
        hid_out_ref[...] = h_new

    return kernel


def prepare_padded_params(params, E, F, H, Denc, V):
    """Host-side (XLA) re-layout: pre-transpose / fuse / zero-pad weights to lane-dense shapes."""
    Hp = _round_up(H, 128)
    Dp = _round_up(Denc, 128)
    Vp = _round_up(V, 128)
    f32, bf16 = jnp.float32, jnp.bfloat16

    # Bahdanau attention Linear(H + Denc -> H): split hidden / encoder parts.
    w_attn = params["w_attn"].astype(f32)
    w_ah = jnp.zeros((Hp, Hp), f32).at[:H, :H].set(w_attn[:H]).astype(bf16)
    w_ae = jnp.zeros((Denc, Hp), f32).at[:, :H].set(w_attn[H:])   # used for hoisted enc projection
    b_a = jnp.zeros((1, Hp), f32).at[:, :H].set(params["b_attn"])
    v_a = jnp.zeros((1, Hp), f32).at[:, :H].set(params["v_attn"])

    # GRU: fuse the 3 gates along lanes; reorder input rows to (weighted | word | feature)
    # so the in-kernel concat boundary is 128-aligned. Gate order stays (r, z, n).
    w_ih = params["w_ih"].astype(f32)                 # [3, E+F+Denc, H], rows: (word, feat, weighted)
    Kin = Dp + E + F
    w_ih_g = jnp.zeros((3, Kin, Hp), f32)
    w_ih_g = w_ih_g.at[:, :Denc, :H].set(w_ih[:, E + F:, :])            # weighted rows
    w_ih_g = w_ih_g.at[:, Dp:Dp + E + F, :H].set(w_ih[:, :E + F, :])    # word|feature rows
    w_ih_all = jnp.transpose(w_ih_g, (1, 0, 2)).reshape(Kin, 3 * Hp).astype(bf16)

    w_hh = params["w_hh"].astype(f32)                 # [3, H, H]
    w_hh_g = jnp.zeros((3, Hp, Hp), f32).at[:, :H, :H].set(w_hh)
    w_hh_all = jnp.transpose(w_hh_g, (1, 0, 2)).reshape(Hp, 3 * Hp).astype(bf16)

    b_ih_all = jnp.zeros((3, Hp), f32).at[:, :H].set(params["b_ih"]).reshape(1, 3 * Hp)
    b_hh_all = jnp.zeros((3, Hp), f32).at[:, :H].set(params["b_hh"]).reshape(1, 3 * Hp)

    # out_layer Linear(H + Denc + E -> V): rows ordered (act | weighted | word), zero-padded.
    w_out = params["w_out"].astype(f32)
    Kout = Hp + Dp + E
    w_out_all = jnp.zeros((Kout, Vp), f32)
    w_out_all = w_out_all.at[:H, :V].set(w_out[:H])
    w_out_all = w_out_all.at[Hp:Hp + Denc, :V].set(w_out[H:H + Denc])
    w_out_all = w_out_all.at[Hp + Dp:Hp + Dp + E, :V].set(w_out[H + Denc:])
    w_out_all = w_out_all.astype(bf16)
    b_out = jnp.zeros((1, Vp), f32).at[:, :V].set(params["b_out"])

    return dict(E=E, F=F, H=H, Denc=Denc, V=V, Hp=Hp, Dp=Dp, Vp=Vp,
                w_ah=w_ah, w_ae=w_ae, b_a=b_a, v_a=v_a,
                w_ih_all=w_ih_all, w_hh_all=w_hh_all,
                b_ih_all=b_ih_all, b_hh_all=b_hh_all,
                w_out_all=w_out_all, b_out=b_out)


def precompute_encoder_context(padded, encoder_outputs):
    """Hidden-independent work, hoisted out of the per-step kernel (run once per sequence)."""
    B, L, Denc = encoder_outputs.shape
    Dp = padded["Dp"]
    enc_proj = jnp.einsum("bld,dh->blh",
                          encoder_outputs.astype(jnp.float32), padded["w_ae"])   # [B, L, Hp] f32
    enc_pad = jnp.zeros((B, L, Dp), jnp.bfloat16).at[:, :, :Denc].set(
        encoder_outputs.astype(jnp.bfloat16))
    return enc_pad, enc_proj


def decoder_step(padded, feature, hidden, actual_word, enc_pad, enc_proj):
    """One decode step: pad batch/lanes, run the Pallas kernel, slice outputs back."""
    E, F, H, V = padded["E"], padded["F"], padded["H"], padded["V"]
    Hp, Dp, Vp = padded["Hp"], padded["Dp"], padded["Vp"]
    B = hidden.shape[0]
    L = enc_pad.shape[1]
    Bp = _round_up(B, 8)

    word = actual_word[:, 0, :]                                        # [B, E] (squeeze seq dim)
    word_feat = jnp.concatenate([word, feature], axis=1)               # [B, E+F]

    wf_p = jnp.zeros((Bp, E + F), jnp.float32).at[:B].set(word_feat)
    hid_p = jnp.zeros((Bp, Hp), jnp.float32).at[:B, :H].set(hidden)
    enc_p = jnp.zeros((Bp, L, Dp), jnp.bfloat16).at[:B].set(enc_pad)
    encp_p = jnp.zeros((Bp, L, Hp), jnp.float32).at[:B].set(enc_proj)

    kernel = make_decoder_step_kernel(E, Hp, V)
    vmem = lambda: pl.BlockSpec(memory_space=pltpu.MemorySpace.VMEM)
    out_shapes = (jax.ShapeDtypeStruct((Bp, Vp), jnp.float32),
                  jax.ShapeDtypeStruct((Bp, Hp), jnp.float32))
    # TODO(synk): for production vocab sizes, tile V with a grid (stream w_out via BlockSpec,
    # "parallel" semantics for v7x's two TensorCores); at these toy shapes one VMEM-resident
    # invocation is fastest.
    fn = pl.pallas_call(
        kernel,
        out_shape=out_shapes,
        in_specs=[vmem() for _ in range(13)],
        out_specs=(vmem(), vmem()),
    )
    logp_p, hid_new_p = fn(
        wf_p, hid_p, enc_p, encp_p,
        padded["w_ah"], padded["b_a"], padded["v_a"],
        padded["w_ih_all"], padded["w_hh_all"],
        padded["b_ih_all"], padded["b_hh_all"],
        padded["w_out_all"], padded["b_out"],
    )
    return logp_p[:B, :V], hid_new_p[:B, :H]


def decoder_lstm_forward(params, feature, hidden, actual_word, encoder_outputs):
    """Matches DecoderLSTM.forward(feature, hidden, actual_word, encoder_outputs)."""
    E = actual_word.shape[-1]
    F = feature.shape[-1]
    H = hidden.shape[-1]
    Denc = encoder_outputs.shape[-1]
    V = params["w_out"].shape[1]
    padded = prepare_padded_params(params, E, F, H, Denc, V)
    enc_pad, enc_proj = precompute_encoder_context(padded, encoder_outputs)
    return decoder_step(padded, feature, hidden, actual_word, enc_pad, enc_proj)


def _reference_forward(params, feature, hidden, actual_word, encoder_outputs):
    """Pure-JAX f32 reference (mirrors the PyTorch module, dropout in eval mode)."""
    H = hidden.shape[-1]
    word = actual_word[:, 0, :]
    w_a = params["w_attn"]
    hid_proj = hidden @ w_a[:H]
    enc_proj = jnp.einsum("bld,dh->blh", encoder_outputs, w_a[H:])
    energy = jnp.tanh(enc_proj + hid_proj[:, None, :] + params["b_attn"][None])
    scores = jnp.sum(energy * params["v_attn"][None], axis=2)
    a = jax.nn.softmax(scores, axis=1)
    weighted = jnp.einsum("bl,bld->bd", a, encoder_outputs)
    x = jnp.concatenate([word, feature, weighted], axis=1)
    gx = jnp.einsum("bk,gkh->gbh", x, params["w_ih"]) + params["b_ih"][:, None, :]
    gh = jnp.einsum("bk,gkh->gbh", hidden, params["w_hh"]) + params["b_hh"][:, None, :]
    r = jax.nn.sigmoid(gx[0] + gh[0])
    z = jax.nn.sigmoid(gx[1] + gh[1])
    n = jnp.tanh(gx[2] + r * gh[2])
    h_new = (1.0 - z) * n + z * hidden
    act = jnp.where(h_new > 0, h_new, 0.01 * h_new)
    out_in = jnp.concatenate([act, weighted, word], axis=1)
    pre = out_in @ params["w_out"] + params["b_out"]
    return jax.nn.log_softmax(pre, axis=1), h_new


if __name__ == "__main__":
    # Small, shape-consistent configuration.
    B = 2                 # batch
    L = 8                 # src_len (encoder sequence length)
    E = 16                # embedding_dim (actual_word feature size)
    F = 8                 # feature vector size
    ENC_HID = 32          # encoder_hid_dem
    DENC = 2 * ENC_HID    # bidirectional encoder output dim = 64
    H = 3 * ENC_HID       # decoder_hid_dem = 96
    DIN = E + F + DENC    # decoder_input_size = 88
    LIN = H + DENC + E    # linear_input_size = 176
    V = 32                # vocab_size

    key = jax.random.PRNGKey(0)
    ks = jax.random.split(key, 16)
    s = 0.1

    params = {
        # Bahdanau attention: Linear(H + Denc -> H), energy vector v[H]
        "w_attn": s * jax.random.normal(ks[0], (H + DENC, H), jnp.float32),
        "b_attn": s * jax.random.normal(ks[1], (1, H), jnp.float32),
        "v_attn": s * jax.random.normal(ks[2], (1, H), jnp.float32),
        # GRU(decoder_input_size -> H), gate order (r, z, n), weights pre-transposed
        "w_ih": s * jax.random.normal(ks[3], (3, DIN, H), jnp.float32),
        "w_hh": s * jax.random.normal(ks[4], (3, H, H), jnp.float32),
        "b_ih": s * jax.random.normal(ks[5], (3, H), jnp.float32),
        "b_hh": s * jax.random.normal(ks[6], (3, H), jnp.float32),
        # out_layer: Linear(linear_input_size -> vocab_size)
        "w_out": s * jax.random.normal(ks[7], (LIN, V), jnp.float32),
        "b_out": s * jax.random.normal(ks[8], (1, V), jnp.float32),
    }

    feature = jax.random.normal(ks[9], (B, F), jnp.float32)
    hidden = jax.random.normal(ks[10], (B, H), jnp.float32)
    actual_word = jax.random.normal(ks[11], (B, 1, E), jnp.float32)
    encoder_outputs = jax.random.normal(ks[12], (B, L, DENC), jnp.float32)

    log_probs, new_hidden = decoder_lstm_forward(
        params, feature, hidden, actual_word, encoder_outputs)
    jax.block_until_ready((log_probs, new_hidden))

    # sanity: shapes, finiteness, log_softmax rows exponentiate to ~1
    assert log_probs.shape == (B, V) and new_hidden.shape == (B, H)
    assert bool(jnp.all(jnp.isfinite(log_probs))) and bool(jnp.all(jnp.isfinite(new_hidden)))
    row_sums = jnp.exp(log_probs).sum(axis=1)
    assert bool(jnp.all(jnp.abs(row_sums - 1.0) < 1e-4))

    # cross-check against pure-JAX f32 reference (loose tolerance: bf16 MXU weights)
    ref_logp, ref_hid = _reference_forward(params, feature, hidden, actual_word, encoder_outputs)
    assert float(jnp.max(jnp.abs(log_probs - ref_logp))) < 0.2
    assert float(jnp.max(jnp.abs(new_hidden - ref_hid))) < 0.2

    print("KERNEL_OK")
</pallas_src>

<mosaic_0001>
module attributes {stable_mosaic.version = 11 : i64} {
  func.func @kernel(%arg0: memref<8x24xf32, #tpu.memory_space<vmem>>, %arg1: memref<8x128xf32, #tpu.memory_space<vmem>>, %arg2: memref<8x8x128xbf16, #tpu.memory_space<vmem>>, %arg3: memref<8x8x128xf32, #tpu.memory_space<vmem>>, %arg4: memref<128x128xbf16, #tpu.memory_space<vmem>>, %arg5: memref<1x128xf32, #tpu.memory_space<vmem>>, %arg6: memref<1x128xf32, #tpu.memory_space<vmem>>, %arg7: memref<152x384xbf16, #tpu.memory_space<vmem>>, %arg8: memref<128x384xbf16, #tpu.memory_space<vmem>>, %arg9: memref<1x384xf32, #tpu.memory_space<vmem>>, %arg10: memref<1x384xf32, #tpu.memory_space<vmem>>, %arg11: memref<272x128xbf16, #tpu.memory_space<vmem>>, %arg12: memref<1x128xf32, #tpu.memory_space<vmem>>, %arg13: memref<8x128xf32, #tpu.memory_space<vmem>>, %arg14: memref<8x128xf32, #tpu.memory_space<vmem>>) attributes {dimension_semantics = [], scalar_prefetch = 0 : i64, scratch_operands = 0 : i64, tpu.core_type = #tpu.core_type<tc>} {
    %c0 = arith.constant 0 : index
    %c0_0 = arith.constant 0 : index
    %0 = vector.load %arg0[%c0, %c0_0] : memref<8x24xf32, #tpu.memory_space<vmem>>, vector<8x24xf32>
    %c0_1 = arith.constant 0 : index
    %c0_2 = arith.constant 0 : index
    %1 = vector.load %arg1[%c0_1, %c0_2] : memref<8x128xf32, #tpu.memory_space<vmem>>, vector<8x128xf32>
    %c0_3 = arith.constant 0 : index
    %c0_4 = arith.constant 0 : index
    %c0_5 = arith.constant 0 : index
    %2 = vector.load %arg2[%c0_3, %c0_4, %c0_5] : memref<8x8x128xbf16, #tpu.memory_space<vmem>>, vector<8x8x128xbf16>
    %c0_6 = arith.constant 0 : index
    %c0_7 = arith.constant 0 : index
    %c0_8 = arith.constant 0 : index
    %3 = vector.load %arg3[%c0_6, %c0_7, %c0_8] : memref<8x8x128xf32, #tpu.memory_space<vmem>>, vector<8x8x128xf32>
    %4 = arith.truncf %1 : vector<8x128xf32> to vector<8x128xbf16>
    %c0_9 = arith.constant 0 : index
    %c0_10 = arith.constant 0 : index
    %5 = vector.load %arg4[%c0_9, %c0_10] : memref<128x128xbf16, #tpu.memory_space<vmem>>, vector<128x128xbf16>
    %cst = arith.constant dense<0.000000e+00> : vector<8x128xf32>
    %6 = tpu.matmul %4, %5, %cst {dimension_numbers = #tpu.dot_dimension_numbers<[1], [0], [0], [1], [0, 0, 1, 1], [], []>} : vector<8x128xbf16>, vector<128x128xbf16>, vector<8x128xf32> -> vector<8x128xf32>
    %7 = vector.shape_cast %6 : vector<8x128xf32> to vector<8x1x128xf32>
    %8 = vector.broadcast %7 : vector<8x1x128xf32> to vector<8x8x128xf32>
    %9 = arith.addf %3, %8 : vector<8x8x128xf32>
    %c0_11 = arith.constant 0 : index
    %c0_12 = arith.constant 0 : index
    %10 = vector.load %arg5[%c0_11, %c0_12] : memref<1x128xf32, #tpu.memory_space<vmem>>, vector<1x128xf32>
    %11 = vector.shape_cast %10 : vector<1x128xf32> to vector<1x1x128xf32>
    %12 = vector.broadcast %11 : vector<1x1x128xf32> to vector<8x8x128xf32>
    %13 = arith.addf %9, %12 : vector<8x8x128xf32>
    %14 = math.tanh %13 : vector<8x8x128xf32>
    %c0_13 = arith.constant 0 : index
    %c0_14 = arith.constant 0 : index
    %15 = vector.load %arg6[%c0_13, %c0_14] : memref<1x128xf32, #tpu.memory_space<vmem>>, vector<1x128xf32>
    %16 = vector.shape_cast %15 : vector<1x128xf32> to vector<1x1x128xf32>
    %17 = vector.broadcast %16 : vector<1x1x128xf32> to vector<8x8x128xf32>
    %18 = arith.mulf %14, %17 : vector<8x8x128xf32>
    %cst_15 = arith.constant dense<0.000000e+00> : vector<8x8xf32>
    %19 = vector.multi_reduction <add>, %18, %cst_15 [2] : vector<8x8x128xf32> to vector<8x8xf32>
    %cst_16 = arith.constant dense<0xFF800000> : vector<8xf32>
    %20 = vector.multi_reduction <maximumf>, %19, %cst_16 [1] : vector<8x8xf32> to vector<8xf32>
    %21 = vector.shape_cast %20 : vector<8xf32> to vector<8x1xf32>
    %22 = vector.broadcast %21 : vector<8x1xf32> to vector<8x8xf32>
    %23 = arith.subf %19, %22 : vector<8x8xf32>
    %24 = math.exp %23 : vector<8x8xf32>
    %cst_17 = arith.constant dense<0.000000e+00> : vector<8xf32>
    %25 = vector.multi_reduction <add>, %24, %cst_17 [1] : vector<8x8xf32> to vector<8xf32>
    %26 = vector.shape_cast %25 : vector<8xf32> to vector<8x1xf32>
    %27 = tpu.reciprocal %26 {approx = true} : vector<8x1xf32> -> vector<8x1xf32>
    %28 = vector.broadcast %27 : vector<8x1xf32> to vector<8x8xf32>
    %29 = arith.mulf %24, %28 : vector<8x8xf32>
    %30 = vector.shape_cast %29 : vector<8x8xf32> to vector<8x8x1xf32>
    %31 = arith.extf %2 : vector<8x8x128xbf16> to vector<8x8x128xf32>
    %32 = vector.broadcast %30 : vector<8x8x1xf32> to vector<8x8x128xf32>
    %33 = arith.mulf %32, %31 : vector<8x8x128xf32>
    %cst_18 = arith.constant dense<0.000000e+00> : vector<8x128xf32>
    %34 = vector.multi_reduction <add>, %33, %cst_18 [1] : vector<8x8x128xf32> to vector<8x128xf32>
    %35 = tpu.concatenate %34, %0 in 1 : vector<8x128xf32>, vector<8x24xf32> -> vector<8x152xf32>
    %36 = arith.truncf %35 : vector<8x152xf32> to vector<8x152xbf16>
    %c0_19 = arith.constant 0 : index
    %c0_20 = arith.constant 0 : index
    %37 = vector.load %arg7[%c0_19, %c0_20] : memref<152x384xbf16, #tpu.memory_space<vmem>>, vector<152x384xbf16>
    %cst_21 = arith.constant dense<0.000000e+00> : vector<8x384xf32>
    %38 = tpu.matmul %36, %37, %cst_21 {dimension_numbers = #tpu.dot_dimension_numbers<[1], [0], [0], [1], [0, 0, 1, 1], [], []>} : vector<8x152xbf16>, vector<152x384xbf16>, vector<8x384xf32> -> vector<8x384xf32>
    %c0_22 = arith.constant 0 : index
    %c0_23 = arith.constant 0 : index
    %39 = vector.load %arg9[%c0_22, %c0_23] : memref<1x384xf32, #tpu.memory_space<vmem>>, vector<1x384xf32>
    %40 = vector.broadcast %39 : vector<1x384xf32> to vector<8x384xf32>
    %41 = arith.addf %38, %40 : vector<8x384xf32>
    %c0_24 = arith.constant 0 : index
    %c0_25 = arith.constant 0 : index
    %42 = vector.load %arg8[%c0_24, %c0_25] : memref<128x384xbf16, #tpu.memory_space<vmem>>, vector<128x384xbf16>
    %cst_26 = arith.constant dense<0.000000e+00> : vector<8x384xf32>
    %43 = tpu.matmul %4, %42, %cst_26 {dimension_numbers = #tpu.dot_dimension_numbers<[1], [0], [0], [1], [0, 0, 1, 1], [], []>} : vector<8x128xbf16>, vector<128x384xbf16>, vector<8x384xf32> -> vector<8x384xf32>
    %c0_27 = arith.constant 0 : index
    %c0_28 = arith.constant 0 : index
    %44 = vector.load %arg10[%c0_27, %c0_28] : memref<1x384xf32, #tpu.memory_space<vmem>>, vector<1x384xf32>
    %45 = vector.broadcast %44 : vector<1x384xf32> to vector<8x384xf32>
    %46 = arith.addf %43, %45 : vector<8x384xf32>
    %47 = vector.extract_strided_slice %41 {offsets = [0, 0], sizes = [8, 128], strides = [1, 1]} : vector<8x384xf32> to vector<8x128xf32>
    %48 = vector.extract_strided_slice %46 {offsets = [0, 0], sizes = [8, 128], strides = [1, 1]} : vector<8x384xf32> to vector<8x128xf32>
    %49 = arith.addf %47, %48 : vector<8x128xf32>
    %50 = arith.negf %49 : vector<8x128xf32>
    %51 = math.exp %50 : vector<8x128xf32>
    %cst_29 = arith.constant 1.000000e+00 : f32
    %52 = vector.broadcast %cst_29 : f32 to vector<8x128xf32>
    %53 = arith.addf %52, %51 : vector<8x128xf32>
    %54 = arith.divf %52, %53 : vector<8x128xf32>
    %55 = vector.extract_strided_slice %41 {offsets = [0, 128], sizes = [8, 128], strides = [1, 1]} : vector<8x384xf32> to vector<8x128xf32>
    %56 = vector.extract_strided_slice %46 {offsets = [0, 128], sizes = [8, 128], strides = [1, 1]} : vector<8x384xf32> to vector<8x128xf32>
    %57 = arith.addf %55, %56 : vector<8x128xf32>
    %58 = arith.negf %57 : vector<8x128xf32>
    %59 = math.exp %58 : vector<8x128xf32>
    %cst_30 = arith.constant 1.000000e+00 : f32
    %60 = vector.broadcast %cst_30 : f32 to vector<8x128xf32>
    %61 = arith.addf %60, %59 : vector<8x128xf32>
    %62 = arith.divf %60, %61 : vector<8x128xf32>
    %63 = vector.extract_strided_slice %41 {offsets = [0, 256], sizes = [8, 128], strides = [1, 1]} : vector<8x384xf32> to vector<8x128xf32>
    %64 = vector.extract_strided_slice %46 {offsets = [0, 256], sizes = [8, 128], strides = [1, 1]} : vector<8x384xf32> to vector<8x128xf32>
    %65 = arith.mulf %54, %64 : vector<8x128xf32>
    %66 = arith.addf %63, %65 : vector<8x128xf32>
    %67 = math.tanh %66 : vector<8x128xf32>
    %cst_31 = arith.constant 1.000000e+00 : f32
    %68 = vector.broadcast %cst_31 : f32 to vector<8x128xf32>
    %69 = arith.subf %68, %62 : vector<8x128xf32>
    %70 = arith.mulf %69, %67 : vector<8x128xf32>
    %71 = arith.mulf %62, %1 : vector<8x128xf32>
    %72 = arith.addf %70, %71 : vector<8x128xf32>
    %cst_32 = arith.constant 0.000000e+00 : f32
    %73 = vector.broadcast %cst_32 : f32 to vector<8x128xf32>
    %74 = arith.cmpf ogt, %72, %73 : vector<8x128xf32>
    %cst_33 = arith.constant 0.00999999977 : f32
    %75 = vector.broadcast %cst_33 : f32 to vector<8x128xf32>
    %76 = arith.mulf %75, %72 : vector<8x128xf32>
    %77 = arith.select %74, %72, %76 : vector<8x128xi1>, vector<8x128xf32>
    %78 = vector.extract_strided_slice %0 {offsets = [0, 0], sizes = [8, 16], strides = [1, 1]} : vector<8x24xf32> to vector<8x16xf32>
    %79 = tpu.concatenate %77, %34, %78 in 1 : vector<8x128xf32>, vector<8x128xf32>, vector<8x16xf32> -> vector<8x272xf32>
    %80 = arith.truncf %79 : vector<8x272xf32> to vector<8x272xbf16>
    %c0_34 = arith.constant 0 : index
    %c0_35 = arith.constant 0 : index
    %81 = vector.load %arg11[%c0_34, %c0_35] : memref<272x128xbf16, #tpu.memory_space<vmem>>, vector<272x128xbf16>
    %cst_36 = arith.constant dense<0.000000e+00> : vector<8x128xf32>
    %82 = tpu.matmul %80, %81, %cst_36 {dimension_numbers = #tpu.dot_dimension_numbers<[1], [0], [0], [1], [0, 0, 1, 1], [], []>} : vector<8x272xbf16>, vector<272x128xbf16>, vector<8x128xf32> -> vector<8x128xf32>
    %c0_37 = arith.constant 0 : index
    %c0_38 = arith.constant 0 : index
    %83 = vector.load %arg12[%c0_37, %c0_38] : memref<1x128xf32, #tpu.memory_space<vmem>>, vector<1x128xf32>
    %84 = vector.broadcast %83 : vector<1x128xf32> to vector<8x128xf32>
    %85 = arith.addf %82, %84 : vector<8x128xf32>
    %86 = tpu.iota {dimensions = array<i32: 1>} : vector<8x128xi32>
    %c32_i32 = arith.constant 32 : i32
    %87 = vector.broadcast %c32_i32 : i32 to vector<8x128xi32>
    %88 = arith.cmpi slt, %86, %87 : vector<8x128xi32>
    %cst_39 = arith.constant -1.000000e+30 : f32
    %89 = vector.broadcast %cst_39 : f32 to vector<8x128xf32>
    %90 = arith.select %88, %85, %89 : vector<8x128xi1>, vector<8x128xf32>
    %cst_40 = arith.constant dense<0xFF800000> : vector<8xf32>
    %91 = vector.multi_reduction <maximumf>, %90, %cst_40 [1] : vector<8x128xf32> to vector<8xf32>
    %92 = vector.shape_cast %91 : vector<8xf32> to vector<8x1xf32>
    %93 = vector.broadcast %92 : vector<8x1xf32> to vector<8x128xf32>
    %94 = arith.subf %90, %93 : vector<8x128xf32>
    %95 = math.exp %94 : vector<8x128xf32>
    %cst_41 = arith.constant dense<0.000000e+00> : vector<8xf32>
    %96 = vector.multi_reduction <add>, %95, %cst_41 [1] : vector<8x128xf32> to vector<8xf32>
    %97 = vector.shape_cast %96 : vector<8xf32> to vector<8x1xf32>
    %98 = math.log %97 : vector<8x1xf32>
    %99 = vector.broadcast %98 : vector<8x1xf32> to vector<8x128xf32>
    %100 = arith.subf %94, %99 : vector<8x128xf32>
    %c0_42 = arith.constant 0 : index
    %c0_43 = arith.constant 0 : index
    %101 = vector.load %arg13[%c0_42, %c0_43] : memref<8x128xf32, #tpu.memory_space<vmem>>, vector<8x128xf32>
    tpu.vector_store %arg13[%c0_42, %c0_43], %100 {strides = array<i32>} : memref<8x128xf32, #tpu.memory_space<vmem>>, vector<8x128xf32>,
    %c0_44 = arith.constant 0 : index
    %c0_45 = arith.constant 0 : index
    %102 = vector.load %arg14[%c0_44, %c0_45] : memref<8x128xf32, #tpu.memory_space<vmem>>, vector<8x128xf32>
    tpu.vector_store %arg14[%c0_44, %c0_45], %72 {strides = array<i32>} : memref<8x128xf32, #tpu.memory_space<vmem>>, vector<8x128xf32>,
    return
  }
}

</mosaic_0001>

<llo_original>
// kernel: tpu_custom_call.1
$region0: #{tpu_custom_call.1}
  #allocation0 [shape = 'u32[]', space=smem, size = 0x4, offset = 0x4, fixed_abs, tag = 'smem constant byte address 0x4 - core index']
  #allocation1 [shape = 'u32[72,128]{1,0:T(1,128)}', space=vmem, size = 0x9000, scoped, tag = 'internal scratch']
  %s0 = inlined_call_operand.hbm [shape: f32[8,24], index: 0, kind: input, shape index: {}]
  %s1 = inlined_call_operand.hbm [shape: f32[8,128], index: 1, kind: input, shape index: {}]
  %s2 = inlined_call_operand.hbm [shape: bf16[8,8,128], index: 2, kind: input, shape index: {}]
  %s3 = inlined_call_operand.hbm [shape: f32[8,8,128], index: 3, kind: input, shape index: {}]
  %s4 = inlined_call_operand.hbm [shape: bf16[128,128], index: 4, kind: input, shape index: {}]
  %s5 = inlined_call_operand.hbm [shape: f32[1,128], index: 5, kind: input, shape index: {}]
  %s6 = inlined_call_operand.hbm [shape: f32[1,128], index: 6, kind: input, shape index: {}]
  %s7 = inlined_call_operand.hbm [shape: bf16[152,384], index: 7, kind: input, shape index: {}]
  %s8 = inlined_call_operand.hbm [shape: bf16[128,384], index: 8, kind: input, shape index: {}]
  %s9 = inlined_call_operand.vmem [shape: f32[1,384], index: 9, kind: input, shape index: {}]
  %s10 = inlined_call_operand.vmem [shape: f32[1,384], index: 10, kind: input, shape index: {}]
  %s11 = inlined_call_operand.hbm [shape: bf16[272,128], index: 11, kind: input, shape index: {}]
  %s12 = inlined_call_operand.vmem [shape: f32[1,128], index: 12, kind: input, shape index: {}]
  %s13 = inlined_call_operand.hbm [shape: f32[8,128], index: 13, kind: output, shape index: {0}]
  %s14 = inlined_call_operand.hbm [shape: f32[8,128], index: 14, kind: output, shape index: {1}]
  %15 = xla_tuple %s13, %s14
  %s16 = sld [smem:[#allocation0]]
  $region110: #{tpu_custom_call.1} parent=0
    _
  %s18 = ssub.s32 1, %s16
  %s19 = scalar_select 0, %s18, %s16
  $region1: #{tpu_custom_call.1} parent=0
    #allocation2 [shape = 'u8[4096]{0}', space=vmem, size = 0x1000, scoped, tag = 'input window, operand 0, single buffered']
    #allocation3 [shape = 's32[1]{0}', space=sflag, size = 0x4, scoped, tag = 'scoped memory for tpu_custom_call.1']
    #allocation4 [shape = 's32[1]{0}', space=sflag, size = 0x4, scoped, tag = 'scoped memory for tpu_custom_call.1']
    #allocation5 [shape = 'u8[4096]{0}', space=vmem, size = 0x1000, scoped, tag = 'input window, operand 1, single buffered']
    #allocation6 [shape = 's32[1]{0}', space=sflag, size = 0x4, scoped, tag = 'scoped memory for tpu_custom_call.1']
    #allocation7 [shape = 'u8[16384]{0}', space=vmem, size = 0x4000, scoped, tag = 'input window, operand 2, single buffered']
    #allocation8 [shape = 'u8[32768]{0}', space=vmem, size = 0x8000, scoped, tag = 'input window, operand 3, single buffered']
    #allocation9 [shape = 's32[1]{0}', space=sflag, size = 0x4, scoped, tag = 'scoped memory for tpu_custom_call.1']
    #allocation10 [shape = 'u8[32768]{0}', space=vmem, size = 0x8000, scoped, tag = 'input window, operand 4, single buffered']
    #allocation11 [shape = 'u8[512]{0}', space=vmem, size = 0x400, scoped, tag = 'input window, operand 5, single buffered']
    #allocation12 [shape = 's32[1]{0}', space=sflag, size = 0x4, scoped, tag = 'scoped memory for tpu_custom_call.1']
    #allocation13 [shape = 'u8[512]{0}', space=vmem, size = 0x400, scoped, tag = 'input window, operand 6, single buffered']
    #allocation14 [shape = 'u8[116736]{0}', space=vmem, size = 0x1c800, scoped, tag = 'input window, operand 7, single buffered']
    #allocation15 [shape = 's32[1]{0}', space=sflag, size = 0x4, scoped, tag = 'scoped memory for tpu_custom_call.1']
    #allocation16 [shape = 'u8[98304]{0}', space=vmem, size = 0x18000, scoped, tag = 'input window, operand 8, single buffered']
    #allocation17 [shape = 'u8[69632]{0}', space=vmem, size = 0x11000, scoped, tag = 'input window, operand 11, single buffered']
    #allocation18 [shape = 's32[1]{0}', space=sflag, size = 0x4, scoped, tag = 'scoped memory for tpu_custom_call.1']
    #allocation19 [shape = 'u8[4096]{0}', space=vmem, size = 0x1000, scoped, tag = 'output window, operand 0, single buffered']
    #allocation20 [shape = 'u8[4096]{0}', space=vmem, size = 0x1000, scoped, tag = 'output window, operand 1, single buffered']
    #allocation21 [shape = 's32[1]{0}', space=sflag, size = 0x4, scoped, tag = 'scoped memory for tpu_custom_call.1']
    %20 = vsyncpa [#allocation3], 0
    %21 = vsyncpa [#allocation6], 0
    %22 = vsyncpa [#allocation9], 0
    %23 = vsyncpa [#allocation12], 0
    %24 = vsyncpa [#allocation15], 0
    %25 = vsyncpa [#allocation18], 0
    %26 = vsyncpa [#allocation4], 0
    %27 = vsyncpa [#allocation21], 0
    // Predicated region
    $region2: #{tpu_custom_call.1} parent=1 // pred_check
      _
    $region3: #{tpu_custom_call.1} parent=1 // pred_check_branch
      %29 = sbr.rel (0) target = $region5
    $region4: #{tpu_custom_call.1} parent=1 // pred_region
      %31 = vsyncadd [#allocation3], 0
      %s33 = sshll.u32 %s0, 4
      %s34 = int_to_ptr.hbm [resolvable:$true] %s33
      %s35 = sshll.u32 [#allocation2], 4
      %s36 = int_to_ptr.vmem [resolvable:$true] %s35
      %38 = dma.hbm_to_vmem [thread:$0]  %s34, 128, %s36, [#allocation3]
    $region5: #{tpu_custom_call.1} parent=1 // pred_fallthru
      _
    // Predicated region
    $region6: #{tpu_custom_call.1} parent=1 // pred_check
      _
    $region7: #{tpu_custom_call.1} parent=1 // pred_check_branch
      %40 = sbr.rel (0) target = $region9
    $region8: #{tpu_custom_call.1} parent=1 // pred_region
      %42 = vsyncadd [#allocation6], 0
      %s44 = sshll.u32 %s1, 4
      %s45 = int_to_ptr.hbm [resolvable:$true] %s44
      %s46 = sshll.u32 [#allocation5], 4
      %s47 = int_to_ptr.vmem [resolvable:$true] %s46
      %49 = dma.hbm_to_vmem [thread:$0]  %s45, 128, %s47, [#allocation6]
    $region9: #{tpu_custom_call.1} parent=1 // pred_fallthru
      _
    // Predicated region
    $region10: #{tpu_custom_call.1} parent=1 // pred_check
      _
    $region11: #{tpu_custom_call.1} parent=1 // pred_check_branch
      %51 = sbr.rel (0) target = $region13
    $region12: #{tpu_custom_call.1} parent=1 // pred_region
      %53 = vsyncadd [#allocation6], 0
      %s54 = sshll.u32 %s2, 4
      %s55 = int_to_ptr.hbm [resolvable:$true] %s54
      %s56 = sshll.u32 [#allocation7], 4
      %s57 = int_to_ptr.vmem [resolvable:$true] %s56
      %62 = dma.hbm_to_vmem [thread:$0]  %s55, 512, %s57, [#allocation6], 64, 64, 4
    $region13: #{tpu_custom_call.1} parent=1 // pred_fallthru
      _
    // Predicated region
    $region14: #{tpu_custom_call.1} parent=1 // pred_check
      _
    $region15: #{tpu_custom_call.1} parent=1 // pred_check_branch
      %64 = sbr.rel (0) target = $region17
    $region16: #{tpu_custom_call.1} parent=1 // pred_region
      %66 = vsyncadd [#allocation9], 0
      %s67 = sshll.u32 %s3, 4
      %s68 = int_to_ptr.hbm [resolvable:$true] %s67
      %s69 = sshll.u32 [#allocation8], 4
      %s70 = int_to_ptr.vmem [resolvable:$true] %s69
      %75 = dma.hbm_to_vmem [thread:$0]  %s68, 1024, %s70, [#allocation9], 128, 128, 8
    $region17: #{tpu_custom_call.1} parent=1 // pred_fallthru
      _
    // Predicated region
    $region18: #{tpu_custom_call.1} parent=1 // pred_check
      _
    $region19: #{tpu_custom_call.1} parent=1 // pred_check_branch
      %77 = sbr.rel (0) target = $region21
    $region20: #{tpu_custom_call.1} parent=1 // pred_region
      %79 = vsyncadd [#allocation9], 0
      %s80 = sshll.u32 %s4, 4
      %s81 = int_to_ptr.hbm [resolvable:$true] %s80
      %s82 = sshll.u32 [#allocation10], 4
      %s83 = int_to_ptr.vmem [resolvable:$true] %s82
      %88 = dma.hbm_to_vmem [thread:$0]  %s81, 1024, %s83, [#allocation9], 64, 64, 4
    $region21: #{tpu_custom_call.1} parent=1 // pred_fallthru
      _
    // Predicated region
    $region22: #{tpu_custom_call.1} parent=1 // pred_check
      _
    $region23: #{tpu_custom_call.1} parent=1 // pred_check_branch
      %90 = sbr.rel (0) target = $region25
    $region24: #{tpu_custom_call.1} parent=1 // pred_region
      %92 = vsyncadd [#allocation12], 0
      %s94 = sshll.u32 %s5, 4
      %s95 = int_to_ptr.hbm [resolvable:$true] %s94
      %s96 = sshll.u32 [#allocation11], 4
      %s97 = int_to_ptr.vmem [resolvable:$true] %s96
      %99 = dma.hbm_to_vmem [thread:$0]  %s95, 16, %s97, [#allocation12]
    $region25: #{tpu_custom_call.1} parent=1 // pred_fallthru
      _
    // Predicated region
    $region26: #{tpu_custom_call.1} parent=1 // pred_check
      _
    $region27: #{tpu_custom_call.1} parent=1 // pred_check_branch
      %101 = sbr.rel (0) target = $region29
    $region28: #{tpu_custom_call.1} parent=1 // pred_region
      %103 = vsyncadd [#allocation12], 0
      %s105 = sshll.u32 %s6, 4
      %s106 = int_to_ptr.hbm [resolvable:$true] %s105
      %s107 = sshll.u32 [#allocation13], 4
      %s108 = int_to_ptr.vmem [resolvable:$true] %s107
      %110 = dma.hbm_to_vmem [thread:$0]  %s106, 16, %s108, [#allocation12]
    $region29: #{tpu_custom_call.1} parent=1 // pred_fallthru
      _
    // Predicated region
    $region30: #{tpu_custom_call.1} parent=1 // pred_check
      _
    $region31: #{tpu_custom_call.1} parent=1 // pred_check_branch
      %112 = sbr.rel (0) target = $region33
    $region32: #{tpu_custom_call.1} parent=1 // pred_region
      %114 = vsyncadd [#allocation15], 0
      %s115 = sshll.u32 %s7, 4
      %s116 = int_to_ptr.hbm [resolvable:$true] %s115
      %s117 = sshll.u32 [#allocation14], 4
      %s118 = int_to_ptr.vmem [resolvable:$true] %s117
      %123 = dma.hbm_to_vmem [thread:$0]  %s116, 3648, %s118, [#allocation15], 192, 192, 12
    $region33: #{tpu_custom_call.1} parent=1 // pred_fallthru
      _
    // Predicated region
    $region34: #{tpu_custom_call.1} parent=1 // pred_check
      _
    $region35: #{tpu_custom_call.1} parent=1 // pred_check_branch
      %125 = sbr.rel (0) target = $region37
    $region36: #{tpu_custom_call.1} parent=1 // pred_region
      %127 = vsyncadd [#allocation15], 0
      %s128 = sshll.u32 %s8, 4
      %s129 = int_to_ptr.hbm [resolvable:$true] %s128
      %s130 = sshll.u32 [#allocation16], 4
      %s131 = int_to_ptr.vmem [resolvable:$true] %s130
      %136 = dma.hbm_to_vmem [thread:$0]  %s129, 3072, %s131, [#allocation15], 192, 192, 12
    $region37: #{tpu_custom_call.1} parent=1 // pred_fallthru
      _
    // Predicated region
    $region38: #{tpu_custom_call.1} parent=1 // pred_check
      _
    $region39: #{tpu_custom_call.1} parent=1 // pred_check_branch
      %138 = sbr.rel (0) target = $region41
    $region40: #{tpu_custom_call.1} parent=1 // pred_region
      _
    $region41: #{tpu_custom_call.1} parent=1 // pred_fallthru
      _
    // Predicated region
    $region42: #{tpu_custom_call.1} parent=1 // pred_check
      _
    $region43: #{tpu_custom_call.1} parent=1 // pred_check_branch
      %140 = sbr.rel (0) target = $region45
    $region44: #{tpu_custom_call.1} parent=1 // pred_region
      _
    $region45: #{tpu_custom_call.1} parent=1 // pred_fallthru
      _
    // Predicated region
    $region46: #{tpu_custom_call.1} parent=1 // pred_check
      _
    $region47: #{tpu_custom_call.1} parent=1 // pred_check_branch
      %142 = sbr.rel (0) target = $region49
    $region48: #{tpu_custom_call.1} parent=1 // pred_region
      %144 = vsyncadd [#allocation18], 0
      %s145 = sshll.u32 %s11, 4
      %s146 = int_to_ptr.hbm [resolvable:$true] %s145
      %s147 = sshll.u32 [#allocation17], 4
      %s148 = int_to_ptr.vmem [resolvable:$true] %s147
      %153 = dma.hbm_to_vmem [thread:$0]  %s146, 2176, %s148, [#allocation18], 64, 64, 4
    $region49: #{tpu_custom_call.1} parent=1 // pred_fallthru
      _
    // Predicated region
    $region50: #{tpu_custom_call.1} parent=1 // pred_check
      _
    $region51: #{tpu_custom_call.1} parent=1 // pred_check_branch
      %155 = sbr.rel (0) target = $region53
    $region52: #{tpu_custom_call.1} parent=1 // pred_region
      _
    $region53: #{tpu_custom_call.1} parent=1 // pred_fallthru
      _
    // Predicated region
    $region54: #{tpu_custom_call.1} parent=1 // pred_check
      _
    $region55: #{tpu_custom_call.1} parent=1 // pred_check_branch
      %157 = sbr.rel (0) target = $region57
    $region56: #{tpu_custom_call.1} parent=1 // pred_region
      %159 = dma.done [#allocation3], 128
    $region57: #{tpu_custom_call.1} parent=1 // pred_fallthru
      _
    // Predicated region
    $region58: #{tpu_custom_call.1} parent=1 // pred_check
      _
    $region59: #{tpu_custom_call.1} parent=1 // pred_check_branch
      %161 = sbr.rel (0) target = $region61
    $region60: #{tpu_custom_call.1} parent=1 // pred_region
      %163 = dma.done [#allocation6], 128
    $region61: #{tpu_custom_call.1} parent=1 // pred_fallthru
      _
    // Predicated region
    $region62: #{tpu_custom_call.1} parent=1 // pred_check
      _
    $region63: #{tpu_custom_call.1} parent=1 // pred_check_branch
      %165 = sbr.rel (0) target = $region65
    $region64: #{tpu_custom_call.1} parent=1 // pred_region
      %167 = dma.done [#allocation6], 512
    $region65: #{tpu_custom_call.1} parent=1 // pred_fallthru
      _
    // Predicated region
    $region66: #{tpu_custom_call.1} parent=1 // pred_check
      _
    $region67: #{tpu_custom_call.1} parent=1 // pred_check_branch
      %169 = sbr.rel (0) target = $region69
    $region68: #{tpu_custom_call.1} parent=1 // pred_region
      %171 = dma.done [#allocation9], 1024
    $region69: #{tpu_custom_call.1} parent=1 // pred_fallthru
      _
    // Predicated region
    $region70: #{tpu_custom_call.1} parent=1 // pred_check
      _
    $region71: #{tpu_custom_call.1} parent=1 // pred_check_branch
      %173 = sbr.rel (0) target = $region73
    $region72: #{tpu_custom_call.1} parent=1 // pred_region
      %175 = dma.done [#allocation9], 1024
    $region73: #{tpu_custom_call.1} parent=1 // pred_fallthru
      _
    // Predicated region
    $region74: #{tpu_custom_call.1} parent=1 // pred_check
      _
    $region75: #{tpu_custom_call.1} parent=1 // pred_check_branch
      %177 = sbr.rel (0) target = $region77
    $region76: #{tpu_custom_call.1} parent=1 // pred_region
      %179 = dma.done [#allocation12], 16
    $region77: #{tpu_custom_call.1} parent=1 // pred_fallthru
      _
    // Predicated region
    $region78: #{tpu_custom_call.1} parent=1 // pred_check
      _
    $region79: #{tpu_custom_call.1} parent=1 // pred_check_branch
      %181 = sbr.rel (0) target = $region81
    $region80: #{tpu_custom_call.1} parent=1 // pred_region
      %183 = dma.done [#allocation12], 16
    $region81: #{tpu_custom_call.1} parent=1 // pred_fallthru
      _
    // Predicated region
    $region82: #{tpu_custom_call.1} parent=1 // pred_check
      _
    $region83: #{tpu_custom_call.1} parent=1 // pred_check_branch
      %185 = sbr.rel (0) target = $region85
    $region84: #{tpu_custom_call.1} parent=1 // pred_region
      %187 = dma.done [#allocation15], 3648
    $region85: #{tpu_custom_call.1} parent=1 // pred_fallthru
      _
    // Predicated region
    $region86: #{tpu_custom_call.1} parent=1 // pred_check
      _
    $region87: #{tpu_custom_call.1} parent=1 // pred_check_branch
      %189 = sbr.rel (0) target = $region89
    $region88: #{tpu_custom_call.1} parent=1 // pred_region
      %191 = dma.done [#allocation15], 3072
    $region89: #{tpu_custom_call.1} parent=1 // pred_fallthru
      _
    // Predicated region
    $region90: #{tpu_custom_call.1} parent=1 // pred_check
      _
    $region91: #{tpu_custom_call.1} parent=1 // pred_check_branch
      %193 = sbr.rel (0) target = $region93
    $region92: #{tpu_custom_call.1} parent=1 // pred_region
      %195 = dma.done [#allocation18], 2176
    $region93: #{tpu_custom_call.1} parent=1 // pred_fallthru
      _
    %v197 = vld [vmem:[#allocation2] sm:$0xff]
    %v198 = vld [vmem:[#allocation5] sm:$0xff]
    %v199 = vld [vmem:[#allocation7] sm:$0xf]
    %v200 = vld [vmem:[#allocation7 + $0x4] sm:$0xf]
    %v201 = vld [vmem:[#allocation7 + $0x8] sm:$0xf]
    %v202 = vld [vmem:[#allocation7 + $0xc] sm:$0xf]
    %v203 = vld [vmem:[#allocation7 + $0x10] sm:$0xf]
    %v204 = vld [vmem:[#allocation7 + $0x14] sm:$0xf]
    %v205 = vld [vmem:[#allocation7 + $0x18] sm:$0xf]
    %v206 = vld [vmem:[#allocation7 + $0x1c] sm:$0xf]
    %v207 = vld [vmem:[#allocation8] sm:$0xff]
    %v208 = vld [vmem:[#allocation8 + $0x8] sm:$0xff]
    %v209 = vld [vmem:[#allocation8 + $0x10] sm:$0xff]
    %v210 = vld [vmem:[#allocation8 + $0x18] sm:$0xff]
    %v211 = vld [vmem:[#allocation8 + $0x20] sm:$0xff]
    %v212 = vld [vmem:[#allocation8 + $0x28] sm:$0xff]
    %v213 = vld [vmem:[#allocation8 + $0x30] sm:$0xff]
    %v214 = vld [vmem:[#allocation8 + $0x38] sm:$0xff]
    %v215 = vpack.c.bf16 %v198, %v198
    %v216 = vld [vmem:[#allocation10] sm:$0xf]
    %v217 = vld [vmem:[#allocation10 + $0x4] sm:$0xf]
    %v218 = vld [vmem:[#allocation10 + $0x8] sm:$0xf]
    %v219 = vld [vmem:[#allocation10 + $0xc] sm:$0xf]
    %v220 = vld [vmem:[#allocation10 + $0x10] sm:$0xf]
    %v221 = vld [vmem:[#allocation10 + $0x14] sm:$0xf]
    %v222 = vld [vmem:[#allocation10 + $0x18] sm:$0xf]
    %v223 = vld [vmem:[#allocation10 + $0x1c] sm:$0xf]
    %v224 = vld [vmem:[#allocation10 + $0x20] sm:$0xf]
    %v225 = vld [vmem:[#allocation10 + $0x24] sm:$0xf]
    %v226 = vld [vmem:[#allocation10 + $0x28] sm:$0xf]
    %v227 = vld [vmem:[#allocation10 + $0x2c] sm:$0xf]
    %v228 = vld [vmem:[#allocation10 + $0x30] sm:$0xf]
    %v229 = vld [vmem:[#allocation10 + $0x34] sm:$0xf]
    %v230 = vld [vmem:[#allocation10 + $0x38] sm:$0xf]
    %v231 = vld [vmem:[#allocation10 + $0x3c] sm:$0xf]
    %v248 = vunpack.c.l.b16 %v216
    %v249 = vunpack.c.l.b16 %v217
    %v250 = vunpack.c.l.b16 %v218
    %v251 = vunpack.c.l.b16 %v219
    %v252 = vunpack.c.l.b16 %v220
    %v253 = vunpack.c.l.b16 %v221
    %v254 = vunpack.c.l.b16 %v222
    %v255 = vunpack.c.l.b16 %v223
    %v256 = vunpack.c.l.b16 %v224
    %v257 = vunpack.c.l.b16 %v225
    %v258 = vunpack.c.l.b16 %v226
    %v259 = vunpack.c.l.b16 %v227
    %v260 = vunpack.c.l.b16 %v228
    %v261 = vunpack.c.l.b16 %v229
    %v262 = vunpack.c.l.b16 %v230
    %v263 = vunpack.c.l.b16 %v231
    %v264 = vpack.c.b16 %v249, %v248
    %v265 = vpack.c.b16 %v251, %v250
    %v266 = vpack.c.b16 %v253, %v252
    %v267 = vpack.c.b16 %v255, %v254
    %v268 = vpack.c.b16 %v257, %v256
    %v269 = vpack.c.b16 %v259, %v258
    %v270 = vpack.c.b16 %v261, %v260
    %v271 = vpack.c.b16 %v263, %v262
    %280 = vmatpush.bf16.msra.mxu0 %v271
    %281 = vmatpush.bf16.msra.mxu0 %v270
    %282 = vmatpush.bf16.msra.mxu0 %v269
    %283 = vmatpush.bf16.msra.mxu0 %v268
    %284 = vmatpush.bf16.msra.mxu0 %v267
    %285 = vmatpush.bf16.msra.mxu0 %v266
    %286 = vmatpush.bf16.msra.mxu0 %v265
    %287 = vmatpush.bf16.msra.mxu0 %v264
    %288 = vmatmul.bf16.gmra.mxu0 %v215
    %v289 = vpop.f32.mrf.mxu0
    %v290 = vadd.f32 0.0, %v289
    %v291 = vpop.f32.mrf.mxu0
    %292 = vdwg.mxu0
    %v294 = vrot.slane %v290, 1
    %v295 = vrot.slane %v290, 2
    %v296 = vrot.slane %v290, 3
    %v297 = vrot.slane %v290, 4
    %v298 = vrot.slane %v290, 5
    %v299 = vrot.slane %v290, 6
    %v300 = vrot.slane %v290, 7
    %v301 = vperm.slane %v290, 0
    %v302 = vperm.slane %v294, 0
    %v303 = vperm.slane %v295, 0
    %v304 = vperm.slane %v296, 0
    %v305 = vperm.slane %v297, 0
    %v306 = vperm.slane %v298, 0
    %v307 = vperm.slane %v299, 0
    %v308 = vperm.slane %v300, 0
    %v317 = vadd.f32 %v207, %v301
    %v318 = vadd.f32 %v208, %v302
    %v319 = vadd.f32 %v209, %v303
    %v320 = vadd.f32 %v210, %v304
    %v321 = vadd.f32 %v211, %v305
    %v322 = vadd.f32 %v212, %v306
    %v323 = vadd.f32 %v213, %v307
    %v324 = vadd.f32 %v214, %v308
    %v325 = vld [vmem:[#allocation11] sm:$0x1]
    %v327 = vperm.slane %v325, 0
    %v329 = vadd.f32 %v317, %v327
    %v330 = vadd.f32 %v318, %v327
    %v331 = vadd.f32 %v319, %v327
    %v332 = vadd.f32 %v320, %v327
    %v333 = vadd.f32 %v321, %v327
    %v334 = vadd.f32 %v322, %v327
    %v335 = vadd.f32 %v323, %v327
    %v336 = vadd.f32 %v324, %v327
    %v337 = vtanh.pop %v329
    %v338 = vtanh.pop %v330
    %v339 = vtanh.pop %v331
    %v340 = vtanh.pop %v332
    %v341 = vtanh.pop %v333
    %v342 = vtanh.pop %v334
    %v343 = vtanh.pop %v335
    %v344 = vtanh.pop %v336
    %v345 = vld [vmem:[#allocation13] sm:$0x1]
    %v347 = vperm.slane %v345, 0
    %v349 = vmul.f32 %v337, %v347
    %v350 = vmul.f32 %v338, %v347
    %v351 = vmul.f32 %v339, %v347
    %v352 = vmul.f32 %v340, %v347
    %v353 = vmul.f32 %v341, %v347
    %v354 = vmul.f32 %v342, %v347
    %v355 = vmul.f32 %v343, %v347
    %v356 = vmul.f32 %v344, %v347
    %357 = vadd.xlane.f32.xlu0 %v349
    %v358 = vpop.xlane.xlu0 %357
    %359 = vadd.xlane.f32.xlu0 %v350
    %v360 = vpop.xlane.xlu0 %359
    %361 = vadd.xlane.f32.xlu0 %v351
    %v362 = vpop.xlane.xlu0 %361
    %363 = vadd.xlane.f32.xlu0 %v352
    %v364 = vpop.xlane.xlu0 %363
    %365 = vadd.xlane.f32.xlu0 %v353
    %v366 = vpop.xlane.xlu0 %365
    %367 = vadd.xlane.f32.xlu0 %v354
    %v368 = vpop.xlane.xlu0 %367
    %369 = vadd.xlane.f32.xlu0 %v355
    %v370 = vpop.xlane.xlu0 %369
    %371 = vadd.xlane.f32.xlu0 %v356
    %v372 = vpop.xlane.xlu0 %371
    %v381 = vlaneseq
    %v382 = vand.u32 %v381, 127
    %v383 = vperm.slane %v358, %v382
    %v384 = vperm.slane %v360, %v382
    %v385 = vperm.slane %v362, %v382
    %v386 = vperm.slane %v364, %v382
    %v387 = vperm.slane %v366, %v382
    %v388 = vperm.slane %v368, %v382
    %v389 = vperm.slane %v370, %v382
    %v390 = vperm.slane %v372, %v382
    %vm391 = vcmask 1041409
    %v392 = vsel %vm391, %v384, %v383
    %vm393 = vcmask 1042434
    %v394 = vsel %vm393, %v385, %v392
    %vm395 = vcmask 1043459
    %v396 = vsel %vm395, %v386, %v394
    %vm397 = vcmask 1044484
    %v398 = vsel %vm397, %v387, %v396
    %vm399 = vcmask 1045509
    %v400 = vsel %vm399, %v388, %v398
    %vm401 = vcmask 1046534
    %v402 = vsel %vm401, %v389, %v400
    %vm403 = vcmask 1047559
    %v404 = vsel %vm403, %v390, %v402
    %vm406 = vcmask 64512
    %v407 = vsel %vm406, %v404, -inf
    %408 = vmax.xlane.f32.xlu0 %v407
    %v409 = vpop.xlane.xlu0 %408
    %v411 = vperm.slane %v409, 0
    %v412 = vperm.slane %v409, 1
    %v413 = vperm.slane %v409, 2
    %v414 = vperm.slane %v409, 3
    %v415 = vperm.slane %v409, 4
    %v416 = vperm.slane %v409, 5
    %v417 = vperm.slane %v409, 6
    %v418 = vperm.slane %v409, 7
    %v427 = vsub.f32 %v358, %v411
    %v428 = vsub.f32 %v360, %v412
    %v429 = vsub.f32 %v362, %v413
    %v430 = vsub.f32 %v364, %v414
    %v431 = vsub.f32 %v366, %v415
    %v432 = vsub.f32 %v368, %v416
    %v433 = vsub.f32 %v370, %v417
    %v434 = vsub.f32 %v372, %v418
    %v435 = vmul.f32 %v427, 1.442695
    %v436 = vpow.pop %v435
    %v437 = vmul.f32 %v428, 1.442695
    %v438 = vpow.pop %v437
    %v439 = vmul.f32 %v429, 1.442695
    %v440 = vpow.pop %v439
    %v441 = vmul.f32 %v430, 1.442695
    %v442 = vpow.pop %v441
    %v443 = vmul.f32 %v431, 1.442695
    %v444 = vpow.pop %v443
    %v445 = vmul.f32 %v432, 1.442695
    %v446 = vpow.pop %v445
    %v447 = vmul.f32 %v433, 1.442695
    %v448 = vpow.pop %v447
    %v449 = vmul.f32 %v434, 1.442695
    %v450 = vpow.pop %v449
    %459 = vset.pattern.permute.xlu0 0
    %460 = vperm.xlu0 %459, %v436
    %v461 = vpop.permute.xlu0 %460
    %462 = vset.pattern.permute.xlu0 0
    %463 = vperm.xlu0 %462, %v438
    %v464 = vpop.permute.xlu0 %463
    %465 = vset.pattern.permute.xlu0 0
    %466 = vperm.xlu0 %465, %v440
    %v467 = vpop.permute.xlu0 %466
    %468 = vset.pattern.permute.xlu0 0
    %469 = vperm.xlu0 %468, %v442
    %v470 = vpop.permute.xlu0 %469
    %471 = vset.pattern.permute.xlu0 0
    %472 = vperm.xlu0 %471, %v444
    %v473 = vpop.permute.xlu0 %472
    %474 = vset.pattern.permute.xlu0 0
    %475 = vperm.xlu0 %474, %v446
    %v476 = vpop.permute.xlu0 %475
    %477 = vset.pattern.permute.xlu0 0
    %478 = vperm.xlu0 %477, %v448
    %v479 = vpop.permute.xlu0 %478
    %480 = vset.pattern.permute.xlu0 0
    %481 = vperm.xlu0 %480, %v450
    %v482 = vpop.permute.xlu0 %481
    %v483 = vperm.slane %v461, %v382
    %v484 = vperm.slane %v464, %v382
    %v485 = vperm.slane %v467, %v382
    %v486 = vperm.slane %v470, %v382
    %v487 = vperm.slane %v473, %v382
    %v488 = vperm.slane %v476, %v382
    %v489 = vperm.slane %v479, %v382
    %v490 = vperm.slane %v482, %v382
    %v491 = vsel %vm391, %v484, %v483
    %v492 = vsel %vm393, %v485, %v491
    %v493 = vsel %vm395, %v486, %v492
    %v494 = vsel %vm397, %v487, %v493
    %v495 = vsel %vm399, %v488, %v494
    %v496 = vsel %vm401, %v489, %v495
    %v497 = vsel %vm403, %v490, %v496
    %v499 = vsel %vm406, %v497, 0.0
    %500 = vadd.xlane.f32.xlu0 %v499
    %v501 = vpop.xlane.xlu0 %500
    %v502 = vrcp.pop %v501
    %v504 = vperm.slane %v502, 0
    %v505 = vperm.slane %v502, 1
    %v506 = vperm.slane %v502, 2
    %v507 = vperm.slane %v502, 3
    %v508 = vperm.slane %v502, 4
    %v509 = vperm.slane %v502, 5
    %v510 = vperm.slane %v502, 6
    %v511 = vperm.slane %v502, 7
    %v520 = vmul.f32 %v436, %v504
    %v521 = vmul.f32 %v438, %v505
    %v522 = vmul.f32 %v440, %v506
    %v523 = vmul.f32 %v442, %v507
    %v524 = vmul.f32 %v444, %v508
    %v525 = vmul.f32 %v446, %v509
    %v526 = vmul.f32 %v448, %v510
    %v527 = vmul.f32 %v450, %v511
    %v528 = vunpack.c.l.bf16 %v199
    %v529 = vunpack.c.l.bf16 %v200
    %v530 = vunpack.c.l.bf16 %v201
    %v531 = vunpack.c.l.bf16 %v202
    %v532 = vunpack.c.l.bf16 %v203
    %v533 = vunpack.c.l.bf16 %v204
    %v534 = vunpack.c.l.bf16 %v205
    %v535 = vunpack.c.l.bf16 %v206
    %537 = vset.pattern.permute.xlu0 0
    %538 = vperm.xlu0 %537, %v520
    %v539 = vpop.permute.xlu0 %538
    %542 = vset.pattern.permute.xlu0 0
    %543 = vperm.xlu0 %542, %v521
    %v544 = vpop.permute.xlu0 %543
    %547 = vset.pattern.permute.xlu0 0
    %548 = vperm.xlu0 %547, %v522
    %v549 = vpop.permute.xlu0 %548
    %552 = vset.pattern.permute.xlu0 0
    %553 = vperm.xlu0 %552, %v523
    %v554 = vpop.permute.xlu0 %553
    %557 = vset.pattern.permute.xlu0 0
    %558 = vperm.xlu0 %557, %v524
    %v559 = vpop.permute.xlu0 %558
    %562 = vset.pattern.permute.xlu0 0
    %563 = vperm.xlu0 %562, %v525
    %v564 = vpop.permute.xlu0 %563
    %567 = vset.pattern.permute.xlu0 0
    %568 = vperm.xlu0 %567, %v526
    %v569 = vpop.permute.xlu0 %568
    %572 = vset.pattern.permute.xlu0 0
    %573 = vperm.xlu0 %572, %v527
    %v574 = vpop.permute.xlu0 %573
    %v576 = vmul.f32 %v539, %v528
    %v577 = vmul.f32 %v544, %v529
    %v578 = vmul.f32 %v549, %v530
    %v579 = vmul.f32 %v554, %v531
    %v580 = vmul.f32 %v559, %v532
    %v581 = vmul.f32 %v564, %v533
    %v582 = vmul.f32 %v569, %v534
    %v583 = vmul.f32 %v574, %v535
    %v584 = vrot.slane %v576, 4
    %v585 = vadd.f32 %v576, %v584
    %v586 = vrot.slane %v585, 2
    %v587 = vadd.f32 %v585, %v586
    %v588 = vrot.slane %v587, 1
    %v589 = vadd.f32 %v587, %v588
    %v590 = vrot.slane %v577, 4
    %v591 = vadd.f32 %v577, %v590
    %v592 = vrot.slane %v591, 2
    %v593 = vadd.f32 %v591, %v592
    %v594 = vrot.slane %v593, 1
    %v595 = vadd.f32 %v593, %v594
    %v596 = vrot.slane %v578, 4
    %v597 = vadd.f32 %v578, %v596
    %v598 = vrot.slane %v597, 2
    %v599 = vadd.f32 %v597, %v598
    %v600 = vrot.slane %v599, 1
    %v601 = vadd.f32 %v599, %v600
    %v602 = vrot.slane %v579, 4
    %v603 = vadd.f32 %v579, %v602
    %v604 = vrot.slane %v603, 2
    %v605 = vadd.f32 %v603, %v604
    %v606 = vrot.slane %v605, 1
    %v607 = vadd.f32 %v605, %v606
    %v608 = vrot.slane %v580, 4
    %v609 = vadd.f32 %v580, %v608
    %v610 = vrot.slane %v609, 2
    %v611 = vadd.f32 %v609, %v610
    %v612 = vrot.slane %v611, 1
    %v613 = vadd.f32 %v611, %v612
    %v614 = vrot.slane %v581, 4
    %v615 = vadd.f32 %v581, %v614
    %v616 = vrot.slane %v615, 2
    %v617 = vadd.f32 %v615, %v616
    %v618 = vrot.slane %v617, 1
    %v619 = vadd.f32 %v617, %v618
    %v620 = vrot.slane %v582, 4
    %v621 = vadd.f32 %v582, %v620
    %v622 = vrot.slane %v621, 2
    %v623 = vadd.f32 %v621, %v622
    %v624 = vrot.slane %v623, 1
    %v625 = vadd.f32 %v623, %v624
    %v626 = vrot.slane %v583, 4
    %v627 = vadd.f32 %v583, %v626
    %v628 = vrot.slane %v627, 2
    %v629 = vadd.f32 %v627, %v628
    %v630 = vrot.slane %v629, 1
    %v631 = vadd.f32 %v629, %v630
    %v640 = vsel %vm391, %v595, %v589
    %v641 = vsel %vm393, %v601, %v640
    %v642 = vsel %vm395, %v607, %v641
    %v643 = vsel %vm397, %v613, %v642
    %v644 = vsel %vm399, %v619, %v643
    %v645 = vsel %vm401, %v625, %v644
    %v646 = vsel %vm403, %v631, %v645
    %v648 = vpack.c.bf16 %v646, %v646
    %v649 = vpack.c.bf16 %v197, %v197
    %v650 = vld [vmem:[#allocation14] sm:$0xff]
    %v651 = vld [vmem:[#allocation14 + $0x8] sm:$0xf]
    %v652 = vld [vmem:[#allocation14 + $0xc] sm:$0xff]
    %v653 = vld [vmem:[#allocation14 + $0x14] sm:$0xf]
    %v654 = vld [vmem:[#allocation14 + $0x18] sm:$0xff]
    %v655 = vld [vmem:[#allocation14 + $0x20] sm:$0xf]
    %v656 = vld [vmem:[#allocation14 + $0x24] sm:$0xff]
    %v657 = vld [vmem:[#allocation14 + $0x2c] sm:$0xf]
    %v658 = vld [vmem:[#allocation14 + $0x30] sm:$0xff]
    %v659 = vld [vmem:[#allocation14 + $0x38] sm:$0xf]
    %v660 = vld [vmem:[#allocation14 + $0x3c] sm:$0xff]
    %v661 = vld [vmem:[#allocation14 + $0x44] sm:$0xf]
    %v662 = vld [vmem:[#allocation14 + $0x48] sm:$0xff]
    %v663 = vld [vmem:[#allocation14 + $0x50] sm:$0xf]
    %v664 = vld [vmem:[#allocation14 + $0x54] sm:$0xff]
    %v665 = vld [vmem:[#allocation14 + $0x5c] sm:$0xf]
    %v666 = vld [vmem:[#allocation14 + $0x60] sm:$0xff]
    %v667 = vld [vmem:[#allocation14 + $0x68] sm:$0xf]
    %v668 = vld [vmem:[#allocation14 + $0x6c] sm:$0xff]
    %v669 = vld [vmem:[#allocation14 + $0x74] sm:$0xf]
    %v670 = vld [vmem:[#allocation14 + $0x78] sm:$0xff]
    %v671 = vld [vmem:[#allocation14 + $0x80] sm:$0xf]
    %v672 = vld [vmem:[#allocation14 + $0x84] sm:$0xff]
    %v673 = vld [vmem:[#allocation14 + $0x8c] sm:$0xf]
    %v674 = vld [vmem:[#allocation14 + $0x90] sm:$0xff]
    %v675 = vld [vmem:[#allocation14 + $0x98] sm:$0xf]
    %v676 = vld [vmem:[#allocation14 + $0x9c] sm:$0xff]
    %v677 = vld [vmem:[#allocation14 + $0xa4] sm:$0xf]
    %v678 = vld [vmem:[#allocation14 + $0xa8] sm:$0xff]
    %v679 = vld [vmem:[#allocation14 + $0xb0] sm:$0xf]
    %v680 = vld [vmem:[#allocation14 + $0xb4] sm:$0xff]
    %v681 = vld [vmem:[#allocation14 + $0xbc] sm:$0xf]
    %v682 = vld [vmem:[#allocation14 + $0xc0] sm:$0xff]
    %v683 = vld [vmem:[#allocation14 + $0xc8] sm:$0xf]
    %v684 = vld [vmem:[#allocation14 + $0xcc] sm:$0xff]
    %v685 = vld [vmem:[#allocation14 + $0xd4] sm:$0xf]
    %v686 = vld [vmem:[#allocation14 + $0xd8] sm:$0xff]
    %v687 = vld [vmem:[#allocation14 + $0xe0] sm:$0xf]
    %v688 = vld [vmem:[%s9] sm:$0x7]
    %v690 = vperm.slane %v688, 0
    %v691 = vperm.slane %v688, 1
    %v692 = vperm.slane %v688, 2
    %v734 = vunpack.c.l.b16 %v650
    %v735 = vunpack.c.h.b16 %v650
    %v736 = vunpack.c.l.b16 %v651
    %v737 = vunpack.c.l.b16 %v652
    %v738 = vunpack.c.h.b16 %v652
    %v739 = vunpack.c.l.b16 %v653
    %v740 = vunpack.c.l.b16 %v654
    %v741 = vunpack.c.h.b16 %v654
    %v742 = vunpack.c.l.b16 %v655
    %v743 = vunpack.c.l.b16 %v656
    %v744 = vunpack.c.h.b16 %v656
    %v745 = vunpack.c.l.b16 %v657
    %v746 = vunpack.c.l.b16 %v658
    %v747 = vunpack.c.h.b16 %v658
    %v748 = vunpack.c.l.b16 %v659
    %v749 = vunpack.c.l.b16 %v660
    %v750 = vunpack.c.h.b16 %v660
    %v751 = vunpack.c.l.b16 %v661
    %v752 = vunpack.c.l.b16 %v662
    %v753 = vunpack.c.h.b16 %v662
    %v754 = vunpack.c.l.b16 %v663
    %v755 = vunpack.c.l.b16 %v664
    %v756 = vunpack.c.h.b16 %v664
    %v757 = vunpack.c.l.b16 %v665
    %v758 = vunpack.c.l.b16 %v666
    %v759 = vunpack.c.h.b16 %v666
    %v760 = vunpack.c.l.b16 %v667
    %v761 = vunpack.c.l.b16 %v668
    %v762 = vunpack.c.h.b16 %v668
    %v763 = vunpack.c.l.b16 %v669
    %v764 = vunpack.c.l.b16 %v670
    %v765 = vunpack.c.h.b16 %v670
    %v766 = vunpack.c.l.b16 %v671
    %v767 = vunpack.c.l.b16 %v672
    %v768 = vunpack.c.h.b16 %v672
    %v769 = vunpack.c.l.b16 %v673
    %v770 = vunpack.c.l.b16 %v674
    %v771 = vunpack.c.h.b16 %v674
    %v772 = vunpack.c.l.b16 %v675
    %v773 = vunpack.c.l.b16 %v676
    %v774 = vunpack.c.h.b16 %v676
    %v775 = vunpack.c.l.b16 %v677
    %v776 = vunpack.c.l.b16 %v678
    %v777 = vunpack.c.h.b16 %v678
    %v778 = vunpack.c.l.b16 %v679
    %v779 = vunpack.c.l.b16 %v680
    %v780 = vunpack.c.h.b16 %v680
    %v781 = vunpack.c.l.b16 %v681
    %v782 = vunpack.c.l.b16 %v682
    %v783 = vunpack.c.h.b16 %v682
    %v784 = vunpack.c.l.b16 %v683
    %v785 = vunpack.c.l.b16 %v684
    %v786 = vunpack.c.h.b16 %v684
    %v787 = vunpack.c.l.b16 %v685
    %v788 = vunpack.c.l.b16 %v686
    %v789 = vunpack.c.h.b16 %v686
    %v790 = vunpack.c.l.b16 %v687
    %v791 = vpack.c.b16 %v737, %v734
    %v792 = vpack.c.b16 %v738, %v735
    %v793 = vpack.c.b16 %v739, %v736
    %v794 = vpack.c.b16 %v743, %v740
    %v795 = vpack.c.b16 %v744, %v741
    %v796 = vpack.c.b16 %v745, %v742
    %v797 = vpack.c.b16 %v749, %v746
    %v798 = vpack.c.b16 %v750, %v747
    %v799 = vpack.c.b16 %v751, %v748
    %v800 = vpack.c.b16 %v755, %v752
    %v801 = vpack.c.b16 %v756, %v753
    %v802 = vpack.c.b16 %v757, %v754
    %v803 = vpack.c.b16 %v761, %v758
    %v804 = vpack.c.b16 %v762, %v759
    %v805 = vpack.c.b16 %v763, %v760
    %v806 = vpack.c.b16 %v767, %v764
    %v807 = vpack.c.b16 %v768, %v765
    %v808 = vpack.c.b16 %v769, %v766
    %v809 = vpack.c.b16 %v773, %v770
    %v810 = vpack.c.b16 %v774, %v771
    %v811 = vpack.c.b16 %v775, %v772
    %v812 = vpack.c.b16 %v779, %v776
    %v813 = vpack.c.b16 %v780, %v777
    %v814 = vpack.c.b16 %v781, %v778
    %v815 = vpack.c.b16 %v785, %v782
    %v816 = vpack.c.b16 %v786, %v783
    %v817 = vpack.c.b16 %v787, %v784
    %v818 = vpack.c.b16 %v788, %v788
    %v819 = vpack.c.b16 %v789, %v789
    %v820 = vpack.c.b16 %v790, %v790
    %vm848 = vcmask 195584
    %v850 = vsel %vm848, %v649, 0
    %vm852 = vcmask 1043456
    %v854 = vsel %vm852, %v818, 0
    %v857 = vsel %vm852, %v819, 0
    %v860 = vsel %vm852, %v820, 0
    %862 = vmatpush.bf16.msra.mxu0 %v812
    %863 = vmatpush.bf16.msra.mxu0 %v809
    %864 = vmatpush.bf16.msra.mxu0 %v806
    %865 = vmatpush.bf16.msra.mxu0 %v803
    %866 = vmatpush.bf16.msra.mxu0 %v800
    %867 = vmatpush.bf16.msra.mxu0 %v797
    %868 = vmatpush.bf16.msra.mxu0 %v794
    %869 = vmatpush.bf16.msra.mxu0 %v791
    %870 = vmatmul.bf16.gmra.mxu0 %v648
    %v871 = vpop.f32.mrf.mxu0
    %v872 = vadd.f32 %v690, %v871
    %v873 = vpop.f32.mrf.mxu0
    %874 = vdwg.mxu0
    %875 = vmatpush.bf16.msra.mxu0 0
    %876 = vmatpush.bf16.msra.mxu0 0
    %877 = vmatpush.bf16.msra.mxu0 0
    %878 = vmatpush.bf16.msra.mxu0 0
    %879 = vmatpush.bf16.msra.mxu0 0
    %880 = vmatpush.bf16.msra.mxu0 0
    %881 = vmatpush.bf16.msra.mxu0 %v854
    %882 = vmatpush.bf16.msra.mxu0 %v815
    %883 = vmatmul.bf16.gmra.mxu0 %v850
    %v884 = vpop.f32.mrf.mxu0
    %v885 = vadd.f32 %v872, %v884
    %v886 = vpop.f32.mrf.mxu0
    %887 = vdwg.mxu0
    %888 = vmatpush.bf16.msra.mxu0 %v813
    %889 = vmatpush.bf16.msra.mxu0 %v810
    %890 = vmatpush.bf16.msra.mxu0 %v807
    %891 = vmatpush.bf16.msra.mxu0 %v804
    %892 = vmatpush.bf16.msra.mxu0 %v801
    %893 = vmatpush.bf16.msra.mxu0 %v798
    %894 = vmatpush.bf16.msra.mxu0 %v795
    %895 = vmatpush.bf16.msra.mxu0 %v792
    %896 = vmatmul.bf16.gmra.mxu0 %v648
    %v897 = vpop.f32.mrf.mxu0
    %v898 = vadd.f32 %v691, %v897
    %v899 = vpop.f32.mrf.mxu0
    %900 = vdwg.mxu0
    %901 = vmatpush.bf16.msra.mxu0 0
    %902 = vmatpush.bf16.msra.mxu0 0
    %903 = vmatpush.bf16.msra.mxu0 0
    %904 = vmatpush.bf16.msra.mxu0 0
    %905 = vmatpush.bf16.msra.mxu0 0
    %906 = vmatpush.bf16.msra.mxu0 0
    %907 = vmatpush.bf16.msra.mxu0 %v857
    %908 = vmatpush.bf16.msra.mxu0 %v816
    %909 = vmatmul.bf16.gmra.mxu0 %v850
    %v910 = vpop.f32.mrf.mxu0
    %v911 = vadd.f32 %v898, %v910
    %v912 = vpop.f32.mrf.mxu0
    %913 = vdwg.mxu0
    %914 = vmatpush.bf16.msra.mxu0 %v814
    %915 = vmatpush.bf16.msra.mxu0 %v811
    %916 = vmatpush.bf16.msra.mxu0 %v808
    %917 = vmatpush.bf16.msra.mxu0 %v805
    %918 = vmatpush.bf16.msra.mxu0 %v802
    %919 = vmatpush.bf16.msra.mxu0 %v799
    %920 = vmatpush.bf16.msra.mxu0 %v796
    %921 = vmatpush.bf16.msra.mxu0 %v793
    %922 = vmatmul.bf16.gmra.mxu0 %v648
    %v923 = vpop.f32.mrf.mxu0
    %v924 = vadd.f32 %v692, %v923
    %v925 = vpop.f32.mrf.mxu0
    %926 = vdwg.mxu0
    %927 = vmatpush.bf16.msra.mxu0 0
    %928 = vmatpush.bf16.msra.mxu0 0
    %929 = vmatpush.bf16.msra.mxu0 0
    %930 = vmatpush.bf16.msra.mxu0 0
    %931 = vmatpush.bf16.msra.mxu0 0
    %932 = vmatpush.bf16.msra.mxu0 0
    %933 = vmatpush.bf16.msra.mxu0 %v860
    %934 = vmatpush.bf16.msra.mxu0 %v817
    %935 = vmatmul.bf16.gmra.mxu0 %v850
    %v936 = vpop.f32.mrf.mxu0
    %v937 = vadd.f32 %v924, %v936
    %v938 = vpop.f32.mrf.mxu0
    %939 = vdwg.mxu0
    %v940 = vld [vmem:[#allocation16] sm:$0xff]
    %v941 = vld [vmem:[#allocation16 + $0x8] sm:$0xf]
    %v942 = vld [vmem:[#allocation16 + $0xc] sm:$0xff]
    %v943 = vld [vmem:[#allocation16 + $0x14] sm:$0xf]
    %v944 = vld [vmem:[#allocation16 + $0x18] sm:$0xff]
    %v945 = vld [vmem:[#allocation16 + $0x20] sm:$0xf]
    %v946 = vld [vmem:[#allocation16 + $0x24] sm:$0xff]
    %v947 = vld [vmem:[#allocation16 + $0x2c] sm:$0xf]
    %v948 = vld [vmem:[#allocation16 + $0x30] sm:$0xff]
    %v949 = vld [vmem:[#allocation16 + $0x38] sm:$0xf]
    %v950 = vld [vmem:[#allocation16 + $0x3c] sm:$0xff]
    %v951 = vld [vmem:[#allocation16 + $0x44] sm:$0xf]
    %v952 = vld [vmem:[#allocation16 + $0x48] sm:$0xff]
    %v953 = vld [vmem:[#allocation16 + $0x50] sm:$0xf]
    %v954 = vld [vmem:[#allocation16 + $0x54] sm:$0xff]
    %v955 = vld [vmem:[#allocation16 + $0x5c] sm:$0xf]
    %v956 = vld [vmem:[#allocation16 + $0x60] sm:$0xff]
    %v957 = vld [vmem:[#allocation16 + $0x68] sm:$0xf]
    %v958 = vld [vmem:[#allocation16 + $0x6c] sm:$0xff]
    %v959 = vld [vmem:[#allocation16 + $0x74] sm:$0xf]
    %v960 = vld [vmem:[#allocation16 + $0x78] sm:$0xff]
    %v961 = vld [vmem:[#allocation16 + $0x80] sm:$0xf]
    %v962 = vld [vmem:[#allocation16 + $0x84] sm:$0xff]
    %v963 = vld [vmem:[#allocation16 + $0x8c] sm:$0xf]
    %v964 = vld [vmem:[#allocation16 + $0x90] sm:$0xff]
    %v965 = vld [vmem:[#allocation16 + $0x98] sm:$0xf]
    %v966 = vld [vmem:[#allocation16 + $0x9c] sm:$0xff]
    %v967 = vld [vmem:[#allocation16 + $0xa4] sm:$0xf]
    %v968 = vld [vmem:[#allocation16 + $0xa8] sm:$0xff]
    %v969 = vld [vmem:[#allocation16 + $0xb0] sm:$0xf]
    %v970 = vld [vmem:[#allocation16 + $0xb4] sm:$0xff]
    %v971 = vld [vmem:[#allocation16 + $0xbc] sm:$0xf]
    %v972 = vld [vmem:[%s10] sm:$0x7]
    %v974 = vperm.slane %v972, 0
    %v975 = vperm.slane %v972, 1
    %v976 = vperm.slane %v972, 2
    %v1012 = vunpack.c.l.b16 %v940
    %v1013 = vunpack.c.h.b16 %v940
    %v1014 = vunpack.c.l.b16 %v941
    %v1015 = vunpack.c.l.b16 %v942
    %v1016 = vunpack.c.h.b16 %v942
    %v1017 = vunpack.c.l.b16 %v943
    %v1018 = vunpack.c.l.b16 %v944
    %v1019 = vunpack.c.h.b16 %v944
    %v1020 = vunpack.c.l.b16 %v945
    %v1021 = vunpack.c.l.b16 %v946
    %v1022 = vunpack.c.h.b16 %v946
    %v1023 = vunpack.c.l.b16 %v947
    %v1024 = vunpack.c.l.b16 %v948
    %v1025 = vunpack.c.h.b16 %v948
    %v1026 = vunpack.c.l.b16 %v949
    %v1027 = vunpack.c.l.b16 %v950
    %v1028 = vunpack.c.h.b16 %v950
    %v1029 = vunpack.c.l.b16 %v951
    %v1030 = vunpack.c.l.b16 %v952
    %v1031 = vunpack.c.h.b16 %v952
    %v1032 = vunpack.c.l.b16 %v953
    %v1033 = vunpack.c.l.b16 %v954
    %v1034 = vunpack.c.h.b16 %v954
    %v1035 = vunpack.c.l.b16 %v955
    %v1036 = vunpack.c.l.b16 %v956
    %v1037 = vunpack.c.h.b16 %v956
    %v1038 = vunpack.c.l.b16 %v957
    %v1039 = vunpack.c.l.b16 %v958
    %v1040 = vunpack.c.h.b16 %v958
    %v1041 = vunpack.c.l.b16 %v959
    %v1042 = vunpack.c.l.b16 %v960
    %v1043 = vunpack.c.h.b16 %v960
    %v1044 = vunpack.c.l.b16 %v961
    %v1045 = vunpack.c.l.b16 %v962
    %v1046 = vunpack.c.h.b16 %v962
    %v1047 = vunpack.c.l.b16 %v963
    %v1048 = vunpack.c.l.b16 %v964
    %v1049 = vunpack.c.h.b16 %v964
    %v1050 = vunpack.c.l.b16 %v965
    %v1051 = vunpack.c.l.b16 %v966
    %v1052 = vunpack.c.h.b16 %v966
    %v1053 = vunpack.c.l.b16 %v967
    %v1054 = vunpack.c.l.b16 %v968
    %v1055 = vunpack.c.h.b16 %v968
    %v1056 = vunpack.c.l.b16 %v969
    %v1057 = vunpack.c.l.b16 %v970
    %v1058 = vunpack.c.h.b16 %v970
    %v1059 = vunpack.c.l.b16 %v971
    %v1060 = vpack.c.b16 %v1015, %v1012
    %v1061 = vpack.c.b16 %v1016, %v1013
    %v1062 = vpack.c.b16 %v1017, %v1014
    %v1063 = vpack.c.b16 %v1021, %v1018
    %v1064 = vpack.c.b16 %v1022, %v1019
    %v1065 = vpack.c.b16 %v1023, %v1020
    %v1066 = vpack.c.b16 %v1027, %v1024
    %v1067 = vpack.c.b16 %v1028, %v1025
    %v1068 = vpack.c.b16 %v1029, %v1026
    %v1069 = vpack.c.b16 %v1033, %v1030
    %v1070 = vpack.c.b16 %v1034, %v1031
    %v1071 = vpack.c.b16 %v1035, %v1032
    %v1072 = vpack.c.b16 %v1039, %v1036
    %v1073 = vpack.c.b16 %v1040, %v1037
    %v1074 = vpack.c.b16 %v1041, %v1038
    %v1075 = vpack.c.b16 %v1045, %v1042
    %v1076 = vpack.c.b16 %v1046, %v1043
    %v1077 = vpack.c.b16 %v1047, %v1044
    %v1078 = vpack.c.b16 %v1051, %v1048
    %v1079 = vpack.c.b16 %v1052, %v1049
    %v1080 = vpack.c.b16 %v1053, %v1050
    %v1081 = vpack.c.b16 %v1057, %v1054
    %v1082 = vpack.c.b16 %v1058, %v1055
    %v1083 = vpack.c.b16 %v1059, %v1056
    %1108 = vmatpush.bf16.msra.mxu0 %v1081
    %1109 = vmatpush.bf16.msra.mxu0 %v1078
    %1110 = vmatpush.bf16.msra.mxu0 %v1075
    %1111 = vmatpush.bf16.msra.mxu0 %v1072
    %1112 = vmatpush.bf16.msra.mxu0 %v1069
    %1113 = vmatpush.bf16.msra.mxu0 %v1066
    %1114 = vmatpush.bf16.msra.mxu0 %v1063
    %1115 = vmatpush.bf16.msra.mxu0 %v1060
    %1116 = vmatmul.bf16.gmra.mxu0 %v215
    %v1117 = vpop.f32.mrf.mxu0
    %v1118 = vadd.f32 %v974, %v1117
    %v1119 = vpop.f32.mrf.mxu0
    %1120 = vdwg.mxu0
    %1121 = vmatpush.bf16.msra.mxu0 %v1082
    %1122 = vmatpush.bf16.msra.mxu0 %v1079
    %1123 = vmatpush.bf16.msra.mxu0 %v1076
    %1124 = vmatpush.bf16.msra.mxu0 %v1073
    %1125 = vmatpush.bf16.msra.mxu0 %v1070
    %1126 = vmatpush.bf16.msra.mxu0 %v1067
    %1127 = vmatpush.bf16.msra.mxu0 %v1064
    %1128 = vmatpush.bf16.msra.mxu0 %v1061
    %1129 = vmatmul.bf16.gmra.mxu0 %v215
    %v1130 = vpop.f32.mrf.mxu0
    %v1131 = vadd.f32 %v975, %v1130
    %v1132 = vpop.f32.mrf.mxu0
    %1133 = vdwg.mxu0
    %1134 = vmatpush.bf16.msra.mxu0 %v1083
    %1135 = vmatpush.bf16.msra.mxu0 %v1080
    %1136 = vmatpush.bf16.msra.mxu0 %v1077
    %1137 = vmatpush.bf16.msra.mxu0 %v1074
    %1138 = vmatpush.bf16.msra.mxu0 %v1071
    %1139 = vmatpush.bf16.msra.mxu0 %v1068
    %1140 = vmatpush.bf16.msra.mxu0 %v1065
    %1141 = vmatpush.bf16.msra.mxu0 %v1062
    %1142 = vmatmul.bf16.gmra.mxu0 %v215
    %v1143 = vpop.f32.mrf.mxu0
    %v1144 = vadd.f32 %v976, %v1143
    %v1145 = vpop.f32.mrf.mxu0
    %1146 = vdwg.mxu0
    %v1147 = vadd.f32 %v885, %v1118
    %v1148 = vxor.u32 %v1147, 2147483648
    %v1149 = vmul.f32 %v1148, 1.442695
    %v1150 = vpow.pop %v1149
    %v1151 = vadd.f32 %v1150, 1.0
    %v1152 = vrcp.pop %v1151
    %v1153 = vmul.f32 %v1151, %v1152
    %v1154 = vsub.f32 1.0, %v1153
    %v1155 = vmul.f32 %v1152, %v1154
    %v1156 = vadd.f32 %v1152, %v1155
    %vm1157 = vweird.f32 %v1151
    %vm1158 = vweird.f32 %v1152
    %vm1159 = vmor %vm1157, %vm1158
    %v1160 = vsel %vm1159, %v1152, %v1156
    %v1161 = vand.u32 2147483647, %v1151
    %vm1162 = vcmp.eq.f32.partialorder %v1161, 8.507059e+37
    %v1163 = vand.u32 %v1151, 2147483648
    %v1164 = vor.u32 1.1754944e-38, %v1163
    %v1165 = vsel %vm1162, %v1164, %v1160
    %v1166 = vmul.f32 1.0, %v1165
    %v1167 = vadd.f32 %v911, %v1131
    %v1168 = vxor.u32 %v1167, 2147483648
    %v1169 = vmul.f32 %v1168, 1.442695
    %v1170 = vpow.pop %v1169
    %v1171 = vadd.f32 %v1170, 1.0
    %v1172 = vrcp.pop %v1171
    %v1173 = vmul.f32 %v1171, %v1172
    %v1174 = vsub.f32 1.0, %v1173
    %v1175 = vmul.f32 %v1172, %v1174
    %v1176 = vadd.f32 %v1172, %v1175
    %vm1177 = vweird.f32 %v1171
    %vm1178 = vweird.f32 %v1172
    %vm1179 = vmor %vm1177, %vm1178
    %v1180 = vsel %vm1179, %v1172, %v1176
    %v1181 = vand.u32 2147483647, %v1171
    %vm1182 = vcmp.eq.f32.partialorder %v1181, 8.507059e+37
    %v1183 = vand.u32 %v1171, 2147483648
    %v1184 = vor.u32 1.1754944e-38, %v1183
    %v1185 = vsel %vm1182, %v1184, %v1180
    %v1186 = vmul.f32 1.0, %v1185
    %v1187 = vmul.f32 %v1166, %v1144
    %v1188 = vadd.f32 %v937, %v1187
    %v1189 = vtanh.pop %v1188
    %v1190 = vsub.f32 1.0, %v1186
    %v1191 = vmul.f32 %v1190, %v1189
    %v1192 = vmul.f32 %v1186, %v198
    %v1193 = vadd.f32 %v1191, %v1192
    %vm1194 = vcmp.gt.f32.partialorder %v1193, 0.0
    %v1195 = vmul.f32 %v1193, 0.01
    %v1196 = vsel %vm1194, %v1193, %v1195
    %v1197 = vpack.c.bf16 %v1196, %v1196
    %v1198 = vld [vmem:[#allocation17] sm:$0xf]
    %v1199 = vld [vmem:[#allocation17 + $0x4] sm:$0xf]
    %v1200 = vld [vmem:[#allocation17 + $0x8] sm:$0xf]
    %v1201 = vld [vmem:[#allocation17 + $0xc] sm:$0xf]
    %v1202 = vld [vmem:[#allocation17 + $0x10] sm:$0xf]
    %v1203 = vld [vmem:[#allocation17 + $0x14] sm:$0xf]
    %v1204 = vld [vmem:[#allocation17 + $0x18] sm:$0xf]
    %v1205 = vld [vmem:[#allocation17 + $0x1c] sm:$0xf]
    %v1206 = vld [vmem:[#allocation17 + $0x20] sm:$0xf]
    %v1207 = vld [vmem:[#allocation17 + $0x24] sm:$0xf]
    %v1208 = vld [vmem:[#allocation17 + $0x28] sm:$0xf]
    %v1209 = vld [vmem:[#allocation17 + $0x2c] sm:$0xf]
    %v1210 = vld [vmem:[#allocation17 + $0x30] sm:$0xf]
    %v1211 = vld [vmem:[#allocation17 + $0x34] sm:$0xf]
    %v1212 = vld [vmem:[#allocation17 + $0x38] sm:$0xf]
    %v1213 = vld [vmem:[#allocation17 + $0x3c] sm:$0xf]
    %v1214 = vld [vmem:[#allocation17 + $0x40] sm:$0xf]
    %v1215 = vld [vmem:[#allocation17 + $0x44] sm:$0xf]
    %v1216 = vld [vmem:[#allocation17 + $0x48] sm:$0xf]
    %v1217 = vld [vmem:[#allocation17 + $0x4c] sm:$0xf]
    %v1218 = vld [vmem:[#allocation17 + $0x50] sm:$0xf]
    %v1219 = vld [vmem:[#allocation17 + $0x54] sm:$0xf]
    %v1220 = vld [vmem:[#allocation17 + $0x58] sm:$0xf]
    %v1221 = vld [vmem:[#allocation17 + $0x5c] sm:$0xf]
    %v1222 = vld [vmem:[#allocation17 + $0x60] sm:$0xf]
    %v1223 = vld [vmem:[#allocation17 + $0x64] sm:$0xf]
    %v1224 = vld [vmem:[#allocation17 + $0x68] sm:$0xf]
    %v1225 = vld [vmem:[#allocation17 + $0x6c] sm:$0xf]
    %v1226 = vld [vmem:[#allocation17 + $0x70] sm:$0xf]
    %v1227 = vld [vmem:[#allocation17 + $0x74] sm:$0xf]
    %v1228 = vld [vmem:[#allocation17 + $0x78] sm:$0xf]
    %v1229 = vld [vmem:[#allocation17 + $0x7c] sm:$0xf]
    %v1230 = vld [vmem:[#allocation17 + $0x80] sm:$0xf]
    %v1231 = vld [vmem:[#allocation17 + $0x84] sm:$0xf]
    %v1232 = vld [vmem:[%s12] sm:$0x1]
    %v1234 = vperm.slane %v1232, 0
    %v1270 = vunpack.c.l.b16 %v1198
    %v1271 = vunpack.c.l.b16 %v1199
    %v1272 = vunpack.c.l.b16 %v1200
    %v1273 = vunpack.c.l.b16 %v1201
    %v1274 = vunpack.c.l.b16 %v1202
    %v1275 = vunpack.c.l.b16 %v1203
    %v1276 = vunpack.c.l.b16 %v1204
    %v1277 = vunpack.c.l.b16 %v1205
    %v1278 = vunpack.c.l.b16 %v1206
    %v1279 = vunpack.c.l.b16 %v1207
    %v1280 = vunpack.c.l.b16 %v1208
    %v1281 = vunpack.c.l.b16 %v1209
    %v1282 = vunpack.c.l.b16 %v1210
    %v1283 = vunpack.c.l.b16 %v1211
    %v1284 = vunpack.c.l.b16 %v1212
    %v1285 = vunpack.c.l.b16 %v1213
    %v1286 = vunpack.c.l.b16 %v1214
    %v1287 = vunpack.c.l.b16 %v1215
    %v1288 = vunpack.c.l.b16 %v1216
    %v1289 = vunpack.c.l.b16 %v1217
    %v1290 = vunpack.c.l.b16 %v1218
    %v1291 = vunpack.c.l.b16 %v1219
    %v1292 = vunpack.c.l.b16 %v1220
    %v1293 = vunpack.c.l.b16 %v1221
    %v1294 = vunpack.c.l.b16 %v1222
    %v1295 = vunpack.c.l.b16 %v1223
    %v1296 = vunpack.c.l.b16 %v1224
    %v1297 = vunpack.c.l.b16 %v1225
    %v1298 = vunpack.c.l.b16 %v1226
    %v1299 = vunpack.c.l.b16 %v1227
    %v1300 = vunpack.c.l.b16 %v1228
    %v1301 = vunpack.c.l.b16 %v1229
    %v1302 = vunpack.c.l.b16 %v1230
    %v1303 = vunpack.c.l.b16 %v1231
    %v1304 = vpack.c.b16 %v1271, %v1270
    %v1305 = vpack.c.b16 %v1273, %v1272
    %v1306 = vpack.c.b16 %v1275, %v1274
    %v1307 = vpack.c.b16 %v1277, %v1276
    %v1308 = vpack.c.b16 %v1279, %v1278
    %v1309 = vpack.c.b16 %v1281, %v1280
    %v1310 = vpack.c.b16 %v1283, %v1282
    %v1311 = vpack.c.b16 %v1285, %v1284
    %v1312 = vpack.c.b16 %v1287, %v1286
    %v1313 = vpack.c.b16 %v1289, %v1288
    %v1314 = vpack.c.b16 %v1291, %v1290
    %v1315 = vpack.c.b16 %v1293, %v1292
    %v1316 = vpack.c.b16 %v1295, %v1294
    %v1317 = vpack.c.b16 %v1297, %v1296
    %v1318 = vpack.c.b16 %v1299, %v1298
    %v1319 = vpack.c.b16 %v1301, %v1300
    %v1320 = vpack.c.b16 %v1303, %v1302
    %vm1338 = vcmask 130048
    %v1339 = vsel %vm1338, %v649, 0
    %1341 = vmatpush.bf16.msra.mxu0 %v1311
    %1342 = vmatpush.bf16.msra.mxu0 %v1310
    %1343 = vmatpush.bf16.msra.mxu0 %v1309
    %1344 = vmatpush.bf16.msra.mxu0 %v1308
    %1345 = vmatpush.bf16.msra.mxu0 %v1307
    %1346 = vmatpush.bf16.msra.mxu0 %v1306
    %1347 = vmatpush.bf16.msra.mxu0 %v1305
    %1348 = vmatpush.bf16.msra.mxu0 %v1304
    %1349 = vmatmul.bf16.gmra.mxu0 %v1197
    %v1350 = vpop.f32.mrf.mxu0
    %v1351 = vadd.f32 %v1234, %v1350
    %v1352 = vpop.f32.mrf.mxu0
    %1353 = vdwg.mxu0
    %1354 = vmatpush.bf16.msra.mxu0 %v1319
    %1355 = vmatpush.bf16.msra.mxu0 %v1318
    %1356 = vmatpush.bf16.msra.mxu0 %v1317
    %1357 = vmatpush.bf16.msra.mxu0 %v1316
    %1358 = vmatpush.bf16.msra.mxu0 %v1315
    %1359 = vmatpush.bf16.msra.mxu0 %v1314
    %1360 = vmatpush.bf16.msra.mxu0 %v1313
    %1361 = vmatpush.bf16.msra.mxu0 %v1312
    %1362 = vmatmul.bf16.gmra.mxu0 %v648
    %v1363 = vpop.f32.mrf.mxu0
    %v1364 = vadd.f32 %v1351, %v1363
    %v1365 = vpop.f32.mrf.mxu0
    %1366 = vdwg.mxu0
    %1367 = vmatpush.bf16.msra.mxu0 0
    %1368 = vmatpush.bf16.msra.mxu0 0
    %1369 = vmatpush.bf16.msra.mxu0 0
    %1370 = vmatpush.bf16.msra.mxu0 0
    %1371 = vmatpush.bf16.msra.mxu0 0
    %1372 = vmatpush.bf16.msra.mxu0 0
    %1373 = vmatpush.bf16.msra.mxu0 0
    %1374 = vmatpush.bf16.msra.mxu0 %v1320
    %1375 = vmatmul.bf16.gmra.mxu0 %v1339
    %v1376 = vpop.f32.mrf.mxu0
    %v1377 = vadd.f32 %v1364, %v1376
    %v1378 = vpop.f32.mrf.mxu0
    %1379 = vdwg.mxu0
    %vm1380 = vcmp.lt.s32.totalorder %v382, 32
    %v1381 = vsel %vm1380, %v1377, -1e+30
    %1382 = vmax.xlane.f32.xlu0 %v1381
    %v1383 = vpop.xlane.xlu0 %1382
    %v1384 = vsub.f32 %v1381, %v1383
    %v1385 = vmul.f32 %v1384, 1.442695
    %v1386 = vpow.pop %v1385
    %1387 = vadd.xlane.f32.xlu0 %v1386
    %v1388 = vpop.xlane.xlu0 %1387
    %v1389 = vlog2.pop %v1388
    %v1390 = vmul.f32 %v1389, 0.6931472
    %v1391 = vsub.f32 %v1384, %v1390
    %1392 = vst [vmem:[#allocation19] sm:$0xff] %v1391
    %1393 = vst [vmem:[#allocation20] sm:$0xff] %v1193
    // Predicated region
    $region94: #{tpu_custom_call.1} parent=1 // pred_check
      _
    $region95: #{tpu_custom_call.1} parent=1 // pred_check_branch
      %1395 = sbr.rel (0) target = $region97
    $region96: #{tpu_custom_call.1} parent=1 // pred_region
      %1397 = vsyncadd [#allocation4], 0
      %s1399 = sshll.u32 [#allocation19], 4
      %s1400 = int_to_ptr.vmem [resolvable:$true] %s1399
      %s1401 = sshll.u32 %s13, 4
      %s1402 = int_to_ptr.hbm [resolvable:$true] %s1401
      %1404 = dma.vmem_to_hbm [thread:$0]  %s1400, 128, %s1402, [#allocation4]
    $region97: #{tpu_custom_call.1} parent=1 // pred_fallthru
      _
    // Predicated region
    $region98: #{tpu_custom_call.1} parent=1 // pred_check
      _
    $region99: #{tpu_custom_call.1} parent=1 // pred_check_branch
      %1406 = sbr.rel (0) target = $region101
    $region100: #{tpu_custom_call.1} parent=1 // pred_region
      %1408 = vsyncadd [#allocation21], 0
      %s1410 = sshll.u32 [#allocation20], 4
      %s1411 = int_to_ptr.vmem [resolvable:$true] %s1410
      %s1412 = sshll.u32 %s14, 4
      %s1413 = int_to_ptr.hbm [resolvable:$true] %s1412
      %1415 = dma.vmem_to_hbm [thread:$0]  %s1411, 128, %s1413, [#allocation21]
    $region101: #{tpu_custom_call.1} parent=1 // pred_fallthru
      _
    // Predicated region
    $region102: #{tpu_custom_call.1} parent=1 // pred_check
      _
    $region103: #{tpu_custom_call.1} parent=1 // pred_check_branch
      %1417 = sbr.rel (0) target = $region105
    $region104: #{tpu_custom_call.1} parent=1 // pred_region
      %1419 = dma.done [#allocation4], 128
    $region105: #{tpu_custom_call.1} parent=1 // pred_fallthru
      _
    // Predicated region
    $region106: #{tpu_custom_call.1} parent=1 // pred_check
      _
    $region107: #{tpu_custom_call.1} parent=1 // pred_check_branch
      %1421 = sbr.rel (0) target = $region109
    $region108: #{tpu_custom_call.1} parent=1 // pred_region
      %1423 = dma.done [#allocation21], 128
    $region109: #{tpu_custom_call.1} parent=1 // pred_fallthru
      _
    %1424 = vsyncpa [#allocation3], 1
    %1425 = vsyncpa [#allocation6], 1
    %1426 = vsyncpa [#allocation9], 1
    %1427 = vsyncpa [#allocation12], 1
    %1428 = vsyncpa [#allocation15], 1
    %1429 = vsyncpa [#allocation18], 1
    %1430 = vsyncpa [#allocation4], 1
    %1431 = vsyncpa [#allocation21], 1

</llo_original>
